<compile_context>
chip_gen: v7x
topology: tpu7x:2x2x1
jax: 0.10.0
libtpu: 0.0.40
codegen_flags: <defaults>
</compile_context>

<pallas_src>
import functools

import jax
import jax.numpy as jnp
from jax import lax
from jax.experimental import pallas as pl
from jax.experimental.pallas import tpu as pltpu


def autopad(k, p=None, d=1):
    if d > 1:
        k = d * (k - 1) + 1 if isinstance(k, int) else [d * (x - 1) + 1 for x in k]
    if p is None:
        p = k // 2 if isinstance(k, int) else [x // 2 for x in k]
    return p


def _round_up(x, m):
    return ((x + m - 1) // m) * m


def _vmem_budget_bytes():
    """Chip-aware scoped-VMEM budget (v5e/v6e: 128 MiB physical, v7x: 64 MiB)."""
    try:
        cap = int(pltpu.get_tpu_info().vmem_capacity_bytes)
    except Exception:
        cap = 64 * 1024 * 1024
    return min(int(cap * 0.6), 72 * 1024 * 1024)


def _divisor_tiles(dim, unit=128, max_tile=1024):
    """128-multiples <= max_tile dividing `dim` (dim is a multiple of 128), descending."""
    return [t for t in range(min(dim, max_tile), unit - 1, -unit) if dim % t == 0]


def _footprint_bytes(tm, tn, tk, k_pad, has_res, out_itemsize):
    """Per-step VMEM footprint (double-buffered inputs/outputs + f32 accumulator)."""
    x_b = 2 * tm * tk * 2            # bf16 x_col tile, double-buffered
    w_b = 2 * k_pad * tn * 2         # bf16 resident weight slab
    b_b = 2 * tn * 4                 # f32 bias row
    o_b = 2 * tm * tn * out_itemsize
    r_b = 2 * tm * tn * 2 if has_res else 0
    acc = tm * tn * 4
    return x_b + w_b + b_b + o_b + r_b + acc


# ---------------------------------------------------------------------------
# Pallas kernel: tiled GEMM + folded-BN bias + SiLU (+ fused residual add)
# ---------------------------------------------------------------------------
def _gemm_bn_silu_body(x_ref, w_ref, b_ref, res_ref, o_ref, acc_ref, *, tk):
    kk = pl.program_id(2)

    @pl.when(kk == 0)
    def _():
        acc_ref[...] = jnp.zeros_like(acc_ref)

    k0 = pl.multiple_of(kk * tk, 128)
    acc_ref[...] += jnp.dot(x_ref[...], w_ref[pl.ds(k0, tk), :],
                            preferred_element_type=jnp.float32)

    @pl.when(kk == pl.num_programs(2) - 1)
    def _():
        y = acc_ref[...] + b_ref[...]
        # SiLU: y * sigmoid(y); exp + exact reciprocal both go to the EUP slot.
        out = y * pl.reciprocal(1.0 + jnp.exp(-y), approx=False)
        if res_ref is not None:
            out = out + res_ref[...].astype(jnp.float32)
        o_ref[...] = out.astype(o_ref.dtype)


def _make_kernel(tk, with_res):
    if with_res:
        def kernel(x_ref, w_ref, b_ref, res_ref, o_ref, acc_ref):
            _gemm_bn_silu_body(x_ref, w_ref, b_ref, res_ref, o_ref, acc_ref, tk=tk)
    else:
        def kernel(x_ref, w_ref, b_ref, o_ref, acc_ref):
            _gemm_bn_silu_body(x_ref, w_ref, b_ref, None, o_ref, acc_ref, tk=tk)
    return kernel


def _fused_gemm_bn_silu(x_col, w_mat, bias, residual=None, *, out_dtype=jnp.bfloat16):
    M, K_pad = x_col.shape
    Kw, N_pad = w_mat.shape
    assert Kw == K_pad and K_pad % 128 == 0 and N_pad % 128 == 0

    has_res = residual is not None
    out_isz = jnp.dtype(out_dtype).itemsize
    budget = _vmem_budget_bytes()
    fit = 0.9 * budget

    M_al = _round_up(M, 128)

    # N tile: prefer the full padded output width (weight stays resident, x_col is
    # read exactly once, lane-dense >=256-wide MXU columns); shrink only if needed.
    tn = 128
    t = N_pad
    while t >= 128:
        if N_pad % t == 0 and _footprint_bytes(128, t, 128, K_pad, has_res, out_isz) <= fit:
            tn = t
            break
        t -= 128

    # K tile.
    tk = 128
    for cand in _divisor_tiles(K_pad, max_tile=512):
        if _footprint_bytes(128, tn, cand, K_pad, has_res, out_isz) <= fit:
            tk = cand
            break

    # M tile: largest 128-multiple divisor of M_al that fits (no M-pad copy when
    # M is already 128-aligned).
    m_cands = _divisor_tiles(M_al)
    tm = m_cands[-1]
    for cand in m_cands:
        if _footprint_bytes(cand, tn, tk, K_pad, has_res, out_isz) <= fit:
            tm = cand
            break

    # Megacore / 2-TC parts: make sure there are >= 2 parallel grid tiles.
    if (M_al // tm) * (N_pad // tn) < 2:
        smaller = [c for c in m_cands if c < tm]
        if smaller:
            tm = smaller[0]

    if M_al != M:  # rare (M not 128-aligned); small ragged pad only.
        x_col = jnp.pad(x_col, ((0, M_al - M), (0, 0)))
        if has_res:
            residual = jnp.pad(residual, ((0, M_al - M), (0, 0)))

    grid = (M_al // tm, N_pad // tn, K_pad // tk)

    in_specs = [
        pl.BlockSpec((tm, tk), lambda i, j, kk: (i, kk)),
        # Resident weight slab: index_map independent of i and kk -> DMA'd once per
        # j-tile (exactly once when tn == N_pad); kernel slices the K tile itself.
        pl.BlockSpec((K_pad, tn), lambda i, j, kk: (0, j)),
        pl.BlockSpec((1, tn), lambda i, j, kk: (0, j)),
    ]
    args = [x_col, w_mat, bias]
    if has_res:
        in_specs.append(pl.BlockSpec((tm, tn), lambda i, j, kk: (i, j)))
        args.append(residual)

    kernel = _make_kernel(tk, has_res)

    bytes_accessed = (x_col.size * x_col.dtype.itemsize
                      + w_mat.size * w_mat.dtype.itemsize
                      + bias.size * bias.dtype.itemsize
                      + M_al * N_pad * out_isz)
    if has_res:
        bytes_accessed += residual.size * residual.dtype.itemsize

    out = pl.pallas_call(
        kernel,
        out_shape=jax.ShapeDtypeStruct((M_al, N_pad), out_dtype),
        grid_spec=pltpu.PrefetchScalarGridSpec(
            num_scalar_prefetch=0,
            grid=grid,
            in_specs=in_specs,
            out_specs=pl.BlockSpec((tm, tn), lambda i, j, kk: (i, j)),
            scratch_shapes=[pltpu.VMEM((tm, tn), jnp.float32)],
        ),
        compiler_params=pltpu.CompilerParams(
            dimension_semantics=("parallel", "parallel", "arbitrary"),
            vmem_limit_bytes=int(budget),
        ),
        cost_estimate=pl.CostEstimate(
            flops=2 * M_al * K_pad * N_pad,
            transcendentals=M_al * N_pad,
            bytes_accessed=int(bytes_accessed),
        ),
    )(*args)
    return out[:M]


# ---------------------------------------------------------------------------
# Conv / RepConvN forward (inference BN folded), NHWC bf16 in / NHWC bf16 out
# ---------------------------------------------------------------------------
def _conv_bn_silu_nhwc(x_nhwc, weight, gamma, beta, mean, var, *,
                       k, s=1, p=None, d=1, eps=1e-5,
                       residual_flat=None, out_dtype=jnp.bfloat16):
    assert d == 1, "dilation > 1 not used by RepNBottleneck"
    p = autopad(k, p, d)

    N, H, W, C1 = x_nhwc.shape
    C2 = weight.shape[0]
    H_out = (H + 2 * p - k) // s + 1
    W_out = (W + 2 * p - k) // s + 1

    xp = jnp.pad(x_nhwc.astype(jnp.bfloat16), ((0, 0), (p, p), (p, p), (0, 0)))

    # im2col (glue), feature order = (kh, kw, c_in), built entirely in bf16.
    patches = []
    for kh in range(k):
        for kw in range(k):
            patches.append(lax.slice(
                xp, (0, kh, kw, 0),
                (N, kh + (H_out - 1) * s + 1, kw + (W_out - 1) * s + 1, C1),
                (1, s, s, 1)))
    x_col = jnp.concatenate(patches, axis=-1).reshape(
        N * H_out * W_out, k * k * C1)

    K = k * k * C1
    K_pad = _round_up(K, 128)
    N_pad = _round_up(C2, 128)

    if K_pad != K:
        x_col = jnp.pad(x_col, ((0, 0), (0, K_pad - K)))  # identity when aligned

    # Fold BatchNorm (inference) into the weight columns (in f32) and a bias.
    scale = gamma.astype(jnp.float32) / jnp.sqrt(var.astype(jnp.float32) + eps)
    bias = beta.astype(jnp.float32) - mean.astype(jnp.float32) * scale
    w_mat = jnp.transpose(weight.astype(jnp.float32), (2, 3, 1, 0)).reshape(K, C2)
    w_mat = w_mat * scale[None, :]
    w_mat = jnp.pad(w_mat, ((0, K_pad - K), (0, N_pad - C2))).astype(jnp.bfloat16)
    bias_p = jnp.pad(bias, (0, N_pad - C2)).reshape(1, N_pad)

    res = None
    if residual_flat is not None:
        assert residual_flat.shape == (N * H_out * W_out, C2)
        res = residual_flat.astype(jnp.bfloat16)
        if N_pad != C2:
            res = jnp.pad(res, ((0, 0), (0, N_pad - C2)))

    out = _fused_gemm_bn_silu(x_col, w_mat, bias_p, res, out_dtype=out_dtype)
    return out[:, :C2].reshape(N, H_out, W_out, C2)


# ---------------------------------------------------------------------------
# RepNBottleneck forward
# ---------------------------------------------------------------------------
def rep_n_bottleneck_forward(x_nchw, params, *, shortcut=True, g=1,
                             k=(3, 3), eps=1e-5):
    assert g == 1  # TODO(synk): grouped conv (g > 1) not implemented.
    N, C1, H, W = x_nchw.shape
    C2 = params["cv2_w"].shape[0]
    add = shortcut and C1 == C2

    # NHWC bf16 end-to-end glue (halves im2col / residual / activation HBM traffic).
    x_nhwc = jnp.transpose(x_nchw, (0, 2, 3, 1)).astype(jnp.bfloat16)

    # cv1 (RepConvN): conv k0 + BN + SiLU; intermediate stays NHWC bf16.
    y1 = _conv_bn_silu_nhwc(
        x_nhwc, params["cv1_w"], params["cv1_gamma"], params["cv1_beta"],
        params["cv1_mean"], params["cv1_var"], k=k[0], s=1, eps=eps,
        out_dtype=jnp.bfloat16)

    # cv2 (Conv): conv k1 + BN + SiLU, residual add fused into the epilogue (bf16 in,
    # f32 add inside the kernel, bf16 out).
    res_flat = x_nhwc.reshape(N * H * W, C1) if add else None
    y2 = _conv_bn_silu_nhwc(
        y1, params["cv2_w"], params["cv2_gamma"], params["cv2_beta"],
        params["cv2_mean"], params["cv2_var"], k=k[1], s=1, eps=eps,
        residual_flat=res_flat, out_dtype=jnp.bfloat16)

    # Transpose in bf16 (half the HBM pass), cast to f32 last.
    return jnp.transpose(y2, (0, 3, 1, 2)).astype(jnp.float32)


# ---------------------------------------------------------------------------
# Pure-JAX reference for verification
# ---------------------------------------------------------------------------
def _conv_bn_silu_ref(x_nchw, weight, gamma, beta, mean, var, *, k, eps=1e-5):
    p = autopad(k)
    y = lax.conv_general_dilated(
        x_nchw.astype(jnp.float32), weight.astype(jnp.float32),
        window_strides=(1, 1), padding=[(p, p), (p, p)],
        dimension_numbers=("NCHW", "OIHW", "NCHW"))
    scale = (gamma / jnp.sqrt(var + eps)).reshape(1, -1, 1, 1)
    bias = (beta - mean * gamma / jnp.sqrt(var + eps)).reshape(1, -1, 1, 1)
    y = y * scale + bias
    return y * jax.nn.sigmoid(y)


def rep_n_bottleneck_ref(x_nchw, params, *, shortcut=True, k=(3, 3), eps=1e-5):
    y = _conv_bn_silu_ref(x_nchw, params["cv1_w"], params["cv1_gamma"],
                          params["cv1_beta"], params["cv1_mean"],
                          params["cv1_var"], k=k[0], eps=eps)
    y = _conv_bn_silu_ref(y, params["cv2_w"], params["cv2_gamma"],
                          params["cv2_beta"], params["cv2_mean"],
                          params["cv2_var"], k=k[1], eps=eps)
    add = shortcut and x_nchw.shape[1] == params["cv2_w"].shape[0]
    return x_nchw + y if add else y


if __name__ == "__main__":
    # RepNBottleneck(c1=8, c2=8, shortcut=True, e=0.5) -> hidden c_ = 4
    N, C1, C2, H, W = 2, 8, 8, 16, 16
    c_hidden = int(C2 * 0.5)
    K1, K2 = 3, 3

    key = jax.random.PRNGKey(0)
    keys = jax.random.split(key, 11)

    params = {
        "cv1_w": jax.random.normal(keys[0], (c_hidden, C1, K1, K1), jnp.float32) * 0.1,
        "cv1_gamma": 1.0 + 0.1 * jax.random.normal(keys[1], (c_hidden,), jnp.float32),
        "cv1_beta": 0.1 * jax.random.normal(keys[2], (c_hidden,), jnp.float32),
        "cv1_mean": 0.05 * jax.random.normal(keys[3], (c_hidden,), jnp.float32),
        "cv1_var": 1.0 + 0.1 * jax.random.uniform(keys[4], (c_hidden,), jnp.float32),
        "cv2_w": jax.random.normal(keys[5], (C2, c_hidden, K2, K2), jnp.float32) * 0.1,
        "cv2_gamma": 1.0 + 0.1 * jax.random.normal(keys[6], (C2,), jnp.float32),
        "cv2_beta": 0.1 * jax.random.normal(keys[7], (C2,), jnp.float32),
        "cv2_mean": 0.05 * jax.random.normal(keys[8], (C2,), jnp.float32),
        "cv2_var": 1.0 + 0.1 * jax.random.uniform(keys[9], (C2,), jnp.float32),
    }
    x = jax.random.normal(keys[10], (N, C1, H, W), jnp.float32)

    fwd = jax.jit(functools.partial(rep_n_bottleneck_forward,
                                    shortcut=True, g=1, k=(K1, K2)))
    out = jax.block_until_ready(fwd(x, params))

    ref = rep_n_bottleneck_ref(x, params, shortcut=True, k=(K1, K2))
    assert out.shape == (N, C2, H, W), out.shape
    max_err = float(jnp.max(jnp.abs(out - ref)))
    # bf16 GEMM operands / glue / residual / output -> loose tolerance (acc is f32).
    assert jnp.allclose(out, ref, atol=3e-2, rtol=3e-2), max_err

    print("KERNEL_OK")
</pallas_src>

<mosaic_0001>
module attributes {stable_mosaic.version = 11 : i64} {
  func.func @kernel(%arg0: i32, %arg1: i32, %arg2: i32, %arg3: memref<256x128xbf16, #tpu.memory_space<vmem>>, %arg4: memref<128x128xbf16, #tpu.memory_space<vmem>>, %arg5: memref<1x128xf32, #tpu.memory_space<vmem>>, %arg6: memref<256x128xbf16, #tpu.memory_space<vmem>>, %arg7: memref<256x128xf32, #tpu.memory_space<vmem>>) attributes {dimension_semantics = [#tpu.dimension_semantics<parallel>, #tpu.dimension_semantics<parallel>, #tpu.dimension_semantics<arbitrary>], iteration_bounds = array<i64: 2, 1, 1>, scalar_prefetch = 0 : i64, scratch_operands = 1 : i64, tpu.core_type = #tpu.core_type<tc>, window_params = [{transform_indices = @transform_0, window_bounds = array<i64: 256, 128>}, {transform_indices = @transform_1, window_bounds = array<i64: 128, 128>}, {transform_indices = @transform_2, window_bounds = array<i64: 1, 128>}, {transform_indices = @transform_3, window_bounds = array<i64: 256, 128>}]} {
    %c0_i32 = arith.constant 0 : i32
    %0 = arith.cmpi eq, %arg2, %c0_i32 : i32
    %1 = arith.extui %0 : i1 to i32
    %c0_i32_0 = arith.constant 0 : i32
    %2 = arith.cmpi ne, %1, %c0_i32_0 : i32
    scf.if %2 {
      %cst_9 = arith.constant 0.000000e+00 : f32
      %15 = vector.broadcast %cst_9 : f32 to vector<256x128xf32>
      %c0_10 = arith.constant 0 : index
      %c0_11 = arith.constant 0 : index
      %16 = vector.load %arg7[%c0_10, %c0_11] : memref<256x128xf32, #tpu.memory_space<vmem>>, vector<256x128xf32>
      tpu.vector_store %arg7[%c0_10, %c0_11], %15 {strides = array<i32>} : memref<256x128xf32, #tpu.memory_space<vmem>>, vector<256x128xf32>,
    } else {
    }
    %c128_i32 = arith.constant 128 : i32
    %3 = arith.muli %arg2, %c128_i32 : i32
    %4 = tpu.assume_multiple %3, 128 : i32
    %c0 = arith.constant 0 : index
    %c0_1 = arith.constant 0 : index
    %5 = vector.load %arg7[%c0, %c0_1] : memref<256x128xf32, #tpu.memory_space<vmem>>, vector<256x128xf32>
    %c0_2 = arith.constant 0 : index
    %c0_3 = arith.constant 0 : index
    %6 = vector.load %arg3[%c0_2, %c0_3] : memref<256x128xbf16, #tpu.memory_space<vmem>>, vector<256x128xbf16>
    %7 = arith.index_cast %4 : i32 to index
    %c0_4 = arith.constant 0 : index
    %8 = vector.load %arg4[%7, %c0_4] : memref<128x128xbf16, #tpu.memory_space<vmem>>, vector<128x128xbf16>
    %cst = arith.constant dense<0.000000e+00> : vector<256x128xf32>
    %9 = tpu.matmul %6, %8, %cst {dimension_numbers = #tpu.dot_dimension_numbers<[1], [0], [0], [1], [0, 0, 1, 1], [], []>} : vector<256x128xbf16>, vector<128x128xbf16>, vector<256x128xf32> -> vector<256x128xf32>
    %10 = arith.addf %5, %9 : vector<256x128xf32>
    %c0_5 = arith.constant 0 : index
    %c0_6 = arith.constant 0 : index
    %11 = vector.load %arg7[%c0_5, %c0_6] : memref<256x128xf32, #tpu.memory_space<vmem>>, vector<256x128xf32>
    tpu.vector_store %arg7[%c0_5, %c0_6], %10 {strides = array<i32>} : memref<256x128xf32, #tpu.memory_space<vmem>>, vector<256x128xf32>,
    %c0_i32_7 = arith.constant 0 : i32
    %12 = arith.cmpi eq, %arg2, %c0_i32_7 : i32
    %13 = arith.extui %12 : i1 to i32
    %c0_i32_8 = arith.constant 0 : i32
    %14 = arith.cmpi ne, %13, %c0_i32_8 : i32
    scf.if %14 {
      %c0_9 = arith.constant 0 : index
      %c0_10 = arith.constant 0 : index
      %15 = vector.load %arg7[%c0_9, %c0_10] : memref<256x128xf32, #tpu.memory_space<vmem>>, vector<256x128xf32>
      %c0_11 = arith.constant 0 : index
      %c0_12 = arith.constant 0 : index
      %16 = vector.load %arg5[%c0_11, %c0_12] : memref<1x128xf32, #tpu.memory_space<vmem>>, vector<1x128xf32>
      %17 = vector.broadcast %16 : vector<1x128xf32> to vector<256x128xf32>
      %18 = arith.addf %15, %17 : vector<256x128xf32>
      %cst_13 = arith.constant 0.000000e+00 : f32
      %19 = vector.broadcast %cst_13 : f32 to vector<256x128xf32>
      %20 = arith.subf %19, %18 : vector<256x128xf32>
      %21 = math.exp %20 : vector<256x128xf32>
      %cst_14 = arith.constant 1.000000e+00 : f32
      %22 = vector.broadcast %cst_14 : f32 to vector<256x128xf32>
      %23 = arith.addf %22, %21 : vector<256x128xf32>
      %24 = tpu.reciprocal %23 : vector<256x128xf32> -> vector<256x128xf32>
      %25 = arith.mulf %18, %24 : vector<256x128xf32>
      %26 = arith.truncf %25 : vector<256x128xf32> to vector<256x128xbf16>
      %c0_15 = arith.constant 0 : index
      %c0_16 = arith.constant 0 : index
      %27 = vector.load %arg6[%c0_15, %c0_16] : memref<256x128xbf16, #tpu.memory_space<vmem>>, vector<256x128xbf16>
      tpu.vector_store %arg6[%c0_15, %c0_16], %26 {strides = array<i32>} : memref<256x128xbf16, #tpu.memory_space<vmem>>, vector<256x128xbf16>,
    } else {
    }
    return
  }
  func.func @transform_0(%arg0: i32, %arg1: i32, %arg2: i32) -> (i32, i32) {
    %c0_i32 = arith.constant 0 : i32
    return %arg0, %arg2 : i32, i32
  }
  func.func @transform_1(%arg0: i32, %arg1: i32, %arg2: i32) -> (i32, i32) {
    %c0_i32 = arith.constant 0 : i32
    %c0_i32_0 = arith.constant 0 : i32
    return %c0_i32, %arg1 : i32, i32
  }
  func.func @transform_2(%arg0: i32, %arg1: i32, %arg2: i32) -> (i32, i32) {
    %c0_i32 = arith.constant 0 : i32
    %c0_i32_0 = arith.constant 0 : i32
    return %c0_i32, %arg1 : i32, i32
  }
  func.func @transform_3(%arg0: i32, %arg1: i32, %arg2: i32) -> (i32, i32) {
    %c0_i32 = arith.constant 0 : i32
    return %arg0, %arg1 : i32, i32
  }
}

module attributes {stable_mosaic.version = 11 : i64} {
  func.func @kernel(%arg0: i32, %arg1: i32, %arg2: i32, %arg3: memref<256x128xbf16, #tpu.memory_space<vmem>>, %arg4: memref<128x128xbf16, #tpu.memory_space<vmem>>, %arg5: memref<1x128xf32, #tpu.memory_space<vmem>>, %arg6: memref<256x128xbf16, #tpu.memory_space<vmem>>, %arg7: memref<256x128xbf16, #tpu.memory_space<vmem>>, %arg8: memref<256x128xf32, #tpu.memory_space<vmem>>) attributes {dimension_semantics = [#tpu.dimension_semantics<parallel>, #tpu.dimension_semantics<parallel>, #tpu.dimension_semantics<arbitrary>], iteration_bounds = array<i64: 2, 1, 1>, scalar_prefetch = 0 : i64, scratch_operands = 1 : i64, tpu.core_type = #tpu.core_type<tc>, window_params = [{transform_indices = @transform_0, window_bounds = array<i64: 256, 128>}, {transform_indices = @transform_1, window_bounds = array<i64: 128, 128>}, {transform_indices = @transform_2, window_bounds = array<i64: 1, 128>}, {transform_indices = @transform_3, window_bounds = array<i64: 256, 128>}, {transform_indices = @transform_4, window_bounds = array<i64: 256, 128>}]} {
    %c0_i32 = arith.constant 0 : i32
    %0 = arith.cmpi eq, %arg2, %c0_i32 : i32
    %1 = arith.extui %0 : i1 to i32
    %c0_i32_0 = arith.constant 0 : i32
    %2 = arith.cmpi ne, %1, %c0_i32_0 : i32
    scf.if %2 {
      %cst_9 = arith.constant 0.000000e+00 : f32
      %15 = vector.broadcast %cst_9 : f32 to vector<256x128xf32>
      %c0_10 = arith.constant 0 : index
      %c0_11 = arith.constant 0 : index
      %16 = vector.load %arg8[%c0_10, %c0_11] : memref<256x128xf32, #tpu.memory_space<vmem>>, vector<256x128xf32>
      tpu.vector_store %arg8[%c0_10, %c0_11], %15 {strides = array<i32>} : memref<256x128xf32, #tpu.memory_space<vmem>>, vector<256x128xf32>,
    } else {
    }
    %c128_i32 = arith.constant 128 : i32
    %3 = arith.muli %arg2, %c128_i32 : i32
    %4 = tpu.assume_multiple %3, 128 : i32
    %c0 = arith.constant 0 : index
    %c0_1 = arith.constant 0 : index
    %5 = vector.load %arg8[%c0, %c0_1] : memref<256x128xf32, #tpu.memory_space<vmem>>, vector<256x128xf32>
    %c0_2 = arith.constant 0 : index
    %c0_3 = arith.constant 0 : index
    %6 = vector.load %arg3[%c0_2, %c0_3] : memref<256x128xbf16, #tpu.memory_space<vmem>>, vector<256x128xbf16>
    %7 = arith.index_cast %4 : i32 to index
    %c0_4 = arith.constant 0 : index
    %8 = vector.load %arg4[%7, %c0_4] : memref<128x128xbf16, #tpu.memory_space<vmem>>, vector<128x128xbf16>
    %cst = arith.constant dense<0.000000e+00> : vector<256x128xf32>
    %9 = tpu.matmul %6, %8, %cst {dimension_numbers = #tpu.dot_dimension_numbers<[1], [0], [0], [1], [0, 0, 1, 1], [], []>} : vector<256x128xbf16>, vector<128x128xbf16>, vector<256x128xf32> -> vector<256x128xf32>
    %10 = arith.addf %5, %9 : vector<256x128xf32>
    %c0_5 = arith.constant 0 : index
    %c0_6 = arith.constant 0 : index
    %11 = vector.load %arg8[%c0_5, %c0_6] : memref<256x128xf32, #tpu.memory_space<vmem>>, vector<256x128xf32>
    tpu.vector_store %arg8[%c0_5, %c0_6], %10 {strides = array<i32>} : memref<256x128xf32, #tpu.memory_space<vmem>>, vector<256x128xf32>,
    %c0_i32_7 = arith.constant 0 : i32
    %12 = arith.cmpi eq, %arg2, %c0_i32_7 : i32
    %13 = arith.extui %12 : i1 to i32
    %c0_i32_8 = arith.constant 0 : i32
    %14 = arith.cmpi ne, %13, %c0_i32_8 : i32
    scf.if %14 {
      %c0_9 = arith.constant 0 : index
      %c0_10 = arith.constant 0 : index
      %15 = vector.load %arg8[%c0_9, %c0_10] : memref<256x128xf32, #tpu.memory_space<vmem>>, vector<256x128xf32>
      %c0_11 = arith.constant 0 : index
      %c0_12 = arith.constant 0 : index
      %16 = vector.load %arg5[%c0_11, %c0_12] : memref<1x128xf32, #tpu.memory_space<vmem>>, vector<1x128xf32>
      %17 = vector.broadcast %16 : vector<1x128xf32> to vector<256x128xf32>
      %18 = arith.addf %15, %17 : vector<256x128xf32>
      %cst_13 = arith.constant 0.000000e+00 : f32
      %19 = vector.broadcast %cst_13 : f32 to vector<256x128xf32>
      %20 = arith.subf %19, %18 : vector<256x128xf32>
      %21 = math.exp %20 : vector<256x128xf32>
      %cst_14 = arith.constant 1.000000e+00 : f32
      %22 = vector.broadcast %cst_14 : f32 to vector<256x128xf32>
      %23 = arith.addf %22, %21 : vector<256x128xf32>
      %24 = tpu.reciprocal %23 : vector<256x128xf32> -> vector<256x128xf32>
      %25 = arith.mulf %18, %24 : vector<256x128xf32>
      %c0_15 = arith.constant 0 : index
      %c0_16 = arith.constant 0 : index
      %26 = vector.load %arg6[%c0_15, %c0_16] : memref<256x128xbf16, #tpu.memory_space<vmem>>, vector<256x128xbf16>
      %27 = arith.extf %26 : vector<256x128xbf16> to vector<256x128xf32>
      %28 = arith.addf %25, %27 : vector<256x128xf32>
      %29 = arith.truncf %28 : vector<256x128xf32> to vector<256x128xbf16>
      %c0_17 = arith.constant 0 : index
      %c0_18 = arith.constant 0 : index
      %30 = vector.load %arg7[%c0_17, %c0_18] : memref<256x128xbf16, #tpu.memory_space<vmem>>, vector<256x128xbf16>
      tpu.vector_store %arg7[%c0_17, %c0_18], %29 {strides = array<i32>} : memref<256x128xbf16, #tpu.memory_space<vmem>>, vector<256x128xbf16>,
    } else {
    }
    return
  }
  func.func @transform_0(%arg0: i32, %arg1: i32, %arg2: i32) -> (i32, i32) {
    %c0_i32 = arith.constant 0 : i32
    return %arg0, %arg2 : i32, i32
  }
  func.func @transform_1(%arg0: i32, %arg1: i32, %arg2: i32) -> (i32, i32) {
    %c0_i32 = arith.constant 0 : i32
    %c0_i32_0 = arith.constant 0 : i32
    return %c0_i32, %arg1 : i32, i32
  }
  func.func @transform_2(%arg0: i32, %arg1: i32, %arg2: i32) -> (i32, i32) {
    %c0_i32 = arith.constant 0 : i32
    %c0_i32_0 = arith.constant 0 : i32
    return %c0_i32, %arg1 : i32, i32
  }
  func.func @transform_3(%arg0: i32, %arg1: i32, %arg2: i32) -> (i32, i32) {
    %c0_i32 = arith.constant 0 : i32
    return %arg0, %arg1 : i32, i32
  }
  func.func @transform_4(%arg0: i32, %arg1: i32, %arg2: i32) -> (i32, i32) {
    %c0_i32 = arith.constant 0 : i32
    return %arg0, %arg1 : i32, i32
  }
}

</mosaic_0001>

<llo_original>
// kernel: rep_n_bottleneck_forward.2
$region0: #{rep_n_bottleneck_forward.2}
  #allocation0 [shape = 'u32[]', space=smem, size = 0x4, offset = 0x4, fixed_abs, tag = 'smem constant byte address 0x4 - core index']
  #allocation1 [shape = 'u32[144,128]{1,0:T(1,128)}', space=vmem, size = 0x12000, scoped, tag = 'internal scratch']
  #allocation2 [shape = 'f32[256,128]{1,0:T(8,128)}', space=vmem, size = 0x20000, scoped, tag = 'scratch operand']
  %s0 = inlined_call_operand.vmem [shape: bf16[512,128], index: 0, kind: input, shape index: {}]
  %s1 = inlined_call_operand.vmem [shape: bf16[128,128], index: 1, kind: input, shape index: {}]
  %s2 = inlined_call_operand.vmem [shape: f32[1,128], index: 2, kind: input, shape index: {}]
  %s3 = inlined_call_operand.vmem [shape: bf16[512,128], index: 3, kind: output, shape index: {}]
  %s4 = sld [smem:[#allocation0]]
  $region53: #{rep_n_bottleneck_forward.2} parent=0
    _
  %s6 = ssub.s32 1, %s4
  %s7 = scalar_select 0, %s6, %s4
  loop: start=0, step=1, limit=4
  $region2: #{rep_n_bottleneck_forward.2} parent=0 // loop_pre_header
    _
  $region3: #{rep_n_bottleneck_forward.2} parent=0 // loop_header
    %s9 = sphi 0, %s13
    %p10 = scmp.ge.s32.totalorder %s9, 4
    %s16 = sphi 0, %s35
    %s17 = sphi 0, %s31
    %s18 = sphi 0, %s27
    %s19 = sphi 0, %s16
    %s20 = sphi 0, %s17
    %s21 = sphi 0, %s18
    %s22 = sphi 0, %s19
    %s23 = sphi 0, %s20
    %s24 = sphi 0, %s21
    %s40 = sphi 0, %s42
    %s43 = sphi 0, %s40
    %s44 = sphi 0, %s43
    %s60 = sphi 0, %s44
    %s66 = sphi 0, %s68
    %s69 = sphi 0, %s66
    %s70 = sphi 0, %s69
    %s86 = sphi 0, %s70
    %s92 = sphi 0, %s94
    %s95 = sphi 0, %s92
    %s96 = sphi 0, %s95
    %s112 = sphi 0, %s96
    %s120 = sphi 0, %s122
    %s123 = sphi 0, %s120
    %s124 = sphi 0, %s123
    %s140 = sphi 0, %s124
  $region4: #{rep_n_bottleneck_forward.2} parent=0 // loop_header_branch
    %12 = sbr.rel (%p10) target = $region8
  $region5: #{rep_n_bottleneck_forward.2} parent=0 // loop_body
    %s14 = ssub.s32 %s9, 1
    %s15 = ssub.s32 %s9, 2
    %s25 = sadd.s32 1, %s18
    %p26 = scmp.ge.s32.totalorder %s25, 1
    %s27 = scalar_select %p26, 0, %s25
    %s28 = sadd.s32 1, %s17
    %s29 = scalar_select %p26, %s28, %s17
    %p30 = scmp.ge.s32.totalorder %s29, 1
    %s31 = scalar_select %p30, 0, %s29
    %s32 = sadd.s32 1, %s16
    %s33 = scalar_select %p30, %s32, %s16
    %p34 = scmp.ge.s32.totalorder %s33, 2
    %s35 = scalar_select %p34, 0, %s33
    %s36 = ssub.s32 %s16, %s35
    %s37 = ssub.s32 %s18, %s27
    %s38 = sor.u32 %s36, %s37
    %p39 = scmp.eq.s32.totalorder %s38, 0
    %s41 = sadd.s32 %s40, 1
    %s42 = scalar_select %p39, %s40, %s41
    %p45 = pneg %p39
    %p46 = scmp.eq.s32.totalorder %s9, 1
    %p47 = por %p45, %p46
    %p48 = scmp.ne.s32.totalorder %s40, %s43
    %p49 = scmp.eq.s32.totalorder %s9, 0
    %p50 = por %p48, %p49
    %p51 = scmp.ne.s32.totalorder %s40, %s43
    %p52 = scmp.eq.s32.totalorder %s14, 1
    %p53 = por %p51, %p52
    %p54 = scmp.ne.s32.totalorder %s43, %s44
    %p55 = scmp.eq.s32.totalorder %s14, 0
    %p56 = por %p54, %p55
    %p57 = scmp.ne.s32.totalorder %s43, %s44
    %p58 = scmp.eq.s32.totalorder %s15, 1
    %p59 = por %p57, %p58
    %p61 = scmp.ne.s32.totalorder %s44, %s60
    %p62 = scmp.eq.s32.totalorder %s15, 0
    %p63 = por %p61, %p62
    %s64 = ssub.s32 %s17, %s31
    %p65 = scmp.eq.s32.totalorder %s64, 0
    %s67 = sadd.s32 %s66, 1
    %s68 = scalar_select %p65, %s66, %s67
    %p71 = pneg %p65
    %p72 = scmp.eq.s32.totalorder %s9, 1
    %p73 = por %p71, %p72
    %p74 = scmp.ne.s32.totalorder %s66, %s69
    %p75 = scmp.eq.s32.totalorder %s9, 0
    %p76 = por %p74, %p75
    %p77 = scmp.ne.s32.totalorder %s66, %s69
    %p78 = scmp.eq.s32.totalorder %s14, 1
    %p79 = por %p77, %p78
    %p80 = scmp.ne.s32.totalorder %s69, %s70
    %p81 = scmp.eq.s32.totalorder %s14, 0
    %p82 = por %p80, %p81
    %p83 = scmp.ne.s32.totalorder %s69, %s70
    %p84 = scmp.eq.s32.totalorder %s15, 1
    %p85 = por %p83, %p84
    %p87 = scmp.ne.s32.totalorder %s70, %s86
    %p88 = scmp.eq.s32.totalorder %s15, 0
    %p89 = por %p87, %p88
    %s90 = ssub.s32 %s17, %s31
    %p91 = scmp.eq.s32.totalorder %s90, 0
    %s93 = sadd.s32 %s92, 1
    %s94 = scalar_select %p91, %s92, %s93
    %p97 = pneg %p91
    %p98 = scmp.eq.s32.totalorder %s9, 1
    %p99 = por %p97, %p98
    %p100 = scmp.ne.s32.totalorder %s92, %s95
    %p101 = scmp.eq.s32.totalorder %s9, 0
    %p102 = por %p100, %p101
    %p103 = scmp.ne.s32.totalorder %s92, %s95
    %p104 = scmp.eq.s32.totalorder %s14, 1
    %p105 = por %p103, %p104
    %p106 = scmp.ne.s32.totalorder %s95, %s96
    %p107 = scmp.eq.s32.totalorder %s14, 0
    %p108 = por %p106, %p107
    %p109 = scmp.ne.s32.totalorder %s95, %s96
    %p110 = scmp.eq.s32.totalorder %s15, 1
    %p111 = por %p109, %p110
    %p113 = scmp.ne.s32.totalorder %s96, %s112
    %p114 = scmp.eq.s32.totalorder %s15, 0
    %p115 = por %p113, %p114
    %s116 = ssub.s32 %s16, %s35
    %s117 = ssub.s32 %s17, %s31
    %s118 = sor.u32 %s116, %s117
    %p119 = scmp.eq.s32.totalorder %s118, 0
    %s121 = sadd.s32 %s120, 1
    %s122 = scalar_select %p119, %s120, %s121
    %p125 = pneg %p119
    %p126 = scmp.eq.s32.totalorder %s9, 1
    %p127 = por %p125, %p126
    %p128 = scmp.ne.s32.totalorder %s120, %s123
    %p129 = scmp.eq.s32.totalorder %s9, 0
    %p130 = por %p128, %p129
    %p131 = scmp.ne.s32.totalorder %s120, %s123
    %p132 = scmp.eq.s32.totalorder %s14, 1
    %p133 = por %p131, %p132
    %p134 = scmp.ne.s32.totalorder %s123, %s124
    %p135 = scmp.eq.s32.totalorder %s14, 0
    %p136 = por %p134, %p135
    %p137 = scmp.ne.s32.totalorder %s123, %s124
    %p138 = scmp.eq.s32.totalorder %s15, 1
    %p139 = por %p137, %p138
    %p141 = scmp.ne.s32.totalorder %s124, %s140
    %p142 = scmp.eq.s32.totalorder %s15, 0
    %p143 = por %p141, %p142
    %p144 = scmp.le.s32.totalorder 1, %s9
    %p145 = scmp.lt.s32.totalorder %s9, 3
    %p146 = pnand %p144, %p145
    %p147 = pneg %p146
    // Predicated region
    $region9: #{rep_n_bottleneck_forward.2} parent=5 // pred_check
      _
    $region10: #{rep_n_bottleneck_forward.2} parent=5 // pred_check_branch
      %149 = sbr.rel (%p146) target = $region12
    $region11: #{rep_n_bottleneck_forward.2} parent=5 // pred_region
      %s150 = ssub.s32 %s9, 1
      // Predicated region
      $region13: #{rep_n_bottleneck_forward.2} parent=11 // pred_check
        %p151 = pneg %p82
      $region14: #{rep_n_bottleneck_forward.2} parent=11 // pred_check_branch
        %153 = sbr.rel (%p151) target = $region16
      $region15: #{rep_n_bottleneck_forward.2} parent=11 // pred_region
        %p154 = scmp.lt.s32.totalorder %s20, 0
        %s155 = scalar_select %p154, %s20, 0
        %s156 = smul.addr %s155, 4
        %s157 = scalar_lea.vmem %s1, %s156
      $region16: #{rep_n_bottleneck_forward.2} parent=11 // pred_fallthru
        _
      // Predicated region
      $region17: #{rep_n_bottleneck_forward.2} parent=11 // pred_check
        %p158 = pneg %p108
      $region18: #{rep_n_bottleneck_forward.2} parent=11 // pred_check_branch
        %160 = sbr.rel (%p158) target = $region20
      $region19: #{rep_n_bottleneck_forward.2} parent=11 // pred_region
        %p161 = scmp.lt.s32.totalorder %s20, 0
        %s162 = scalar_select %p161, %s20, 0
        %s163 = scalar_lea.vmem %s2, %s162
      $region20: #{rep_n_bottleneck_forward.2} parent=11 // pred_fallthru
        _
    $region12: #{rep_n_bottleneck_forward.2} parent=5 // pred_fallthru
      _
    %p164 = scmp.lt.s32.totalorder %s9, 2
    // Predicated region
    $region21: #{rep_n_bottleneck_forward.2} parent=5 // pred_check
      %p165 = pneg %p164
    $region22: #{rep_n_bottleneck_forward.2} parent=5 // pred_check_branch
      %167 = sbr.rel (%p165) target = $region24
    $region23: #{rep_n_bottleneck_forward.2} parent=5 // pred_region
      // Predicated region
      $region25: #{rep_n_bottleneck_forward.2} parent=23 // pred_check
        %p168 = pneg %p50
      $region26: #{rep_n_bottleneck_forward.2} parent=23 // pred_check_branch
        %170 = sbr.rel (%p168) target = $region28
      $region27: #{rep_n_bottleneck_forward.2} parent=23 // pred_region
        %s171 = smul.u32 32, %s16
        %p172 = scmp.lt.s32.totalorder %s171, 63
        %s173 = scalar_select %p172, %s171, 63
        %p174 = scmp.lt.s32.totalorder %s18, 0
        %s175 = scalar_select %p174, %s18, 0
        %s176 = sadd.s32 %s175, %s173
        %s177 = smul.addr %s176, 4
        %s178 = scalar_lea.vmem %s0, %s177
        %s179 = smul.u32 32, %s16
      $region28: #{rep_n_bottleneck_forward.2} parent=23 // pred_fallthru
        _
    $region24: #{rep_n_bottleneck_forward.2} parent=5 // pred_fallthru
      _
    %p180 = scmp.le.s32.totalorder 1, %s9
    %p181 = scmp.lt.s32.totalorder %s9, 3
    %p182 = pnand %p180, %p181
    %p183 = pneg %p182
    // Predicated region
    $region29: #{rep_n_bottleneck_forward.2} parent=5 // pred_check
      _
    $region30: #{rep_n_bottleneck_forward.2} parent=5 // pred_check_branch
      %185 = sbr.rel (%p182) target = $region32
    $region31: #{rep_n_bottleneck_forward.2} parent=5 // pred_region
      %s186 = ssub.s32 %s9, 1
      %s187 = smul.u32 32, %s19
      %p188 = scmp.lt.s32.totalorder %s187, 63
      %s189 = scalar_select %p188, %s187, 63
      %p190 = scmp.lt.s32.totalorder %s21, 0
      %s191 = scalar_select %p190, %s21, 0
      %s192 = sadd.s32 %s191, %s189
      %s193 = smul.addr %s192, 4
      %s194 = scalar_lea.vmem %s0, %s193
      %p195 = pneg %p56
      %p196 = pneg %p53
      %p197 = scmp.lt.s32.totalorder %s20, 0
      %s198 = scalar_select %p197, %s20, 0
      %s199 = smul.addr %s198, 4
      %s200 = scalar_lea.vmem %s1, %s199
      %p201 = pneg %p82
      %p202 = pneg %p79
      %p203 = scmp.lt.s32.totalorder %s20, 0
      %s204 = scalar_select %p203, %s20, 0
      %s205 = scalar_lea.vmem %s2, %s204
      %p206 = pneg %p108
      %p207 = pneg %p105
      %p208 = pneg %p136
      %p209 = pneg %p133
      %s210 = smul.u32 32, %s19
      %p211 = scmp.lt.s32.totalorder %s210, 63
      %s212 = scalar_select %p211, %s210, 63
      %p213 = scmp.lt.s32.totalorder %s20, 0
      %s214 = scalar_select %p213, %s20, 0
      %s215 = sadd.s32 %s214, %s212
      %s216 = smul.addr %s215, 4
      %s217 = scalar_lea.vmem %s3, %s216
      %s218 = smul.u32 32, %s19
      %p219 = scmp.lt.s32.totalorder %s218, 63
      %s220 = scalar_select %p219, %s218, 63
      %p221 = scmp.lt.s32.totalorder %s21, 0
      %s222 = scalar_select %p221, %s21, 0
      %s223 = sadd.s32 %s222, %s220
      %s224 = smul.addr %s223, 4
      %s225 = scalar_lea.vmem %s0, %s224
      %s226 = smul.u32 32, %s19
      %p227 = scmp.lt.s32.totalorder %s20, 0
      %s228 = scalar_select %p227, %s20, 0
      %s229 = smul.addr %s228, 4
      %s230 = scalar_lea.vmem %s1, %s229
      %p231 = scmp.lt.s32.totalorder %s20, 0
      %s232 = scalar_select %p231, %s20, 0
      %s233 = scalar_lea.vmem %s2, %s232
      %s234 = smul.u32 32, %s19
      %p235 = scmp.lt.s32.totalorder %s234, 63
      %s236 = scalar_select %p235, %s234, 63
      %p237 = scmp.lt.s32.totalorder %s20, 0
      %s238 = scalar_select %p237, %s20, 0
      %s239 = sadd.s32 %s238, %s236
      %s240 = smul.addr %s239, 4
      %s241 = scalar_lea.vmem %s3, %s240
      %s242 = smul.u32 32, %s19
      %p244 = scmp.eq.s32.totalorder %s21, 0
      // Predicated region
      $region33: #{rep_n_bottleneck_forward.2} parent=31 // pred_check
        %p245 = pneg %p244
      $region34: #{rep_n_bottleneck_forward.2} parent=31 // pred_check_branch
        %247 = sbr.rel (%p245) target = $region36
      $region35: #{rep_n_bottleneck_forward.2} parent=31 // pred_region
        %248 = vst [vmem:[#allocation2] sm:$0xff] 0.0
        %249 = vst [vmem:[#allocation2 + $0x8] sm:$0xff] 0.0
        %250 = vst [vmem:[#allocation2 + $0x10] sm:$0xff] 0.0
        %251 = vst [vmem:[#allocation2 + $0x18] sm:$0xff] 0.0
        %252 = vst [vmem:[#allocation2 + $0x20] sm:$0xff] 0.0
        %253 = vst [vmem:[#allocation2 + $0x28] sm:$0xff] 0.0
        %254 = vst [vmem:[#allocation2 + $0x30] sm:$0xff] 0.0
        %255 = vst [vmem:[#allocation2 + $0x38] sm:$0xff] 0.0
        %256 = vst [vmem:[#allocation2 + $0x40] sm:$0xff] 0.0
        %257 = vst [vmem:[#allocation2 + $0x48] sm:$0xff] 0.0
        %258 = vst [vmem:[#allocation2 + $0x50] sm:$0xff] 0.0
        %259 = vst [vmem:[#allocation2 + $0x58] sm:$0xff] 0.0
        %260 = vst [vmem:[#allocation2 + $0x60] sm:$0xff] 0.0
        %261 = vst [vmem:[#allocation2 + $0x68] sm:$0xff] 0.0
        %262 = vst [vmem:[#allocation2 + $0x70] sm:$0xff] 0.0
        %263 = vst [vmem:[#allocation2 + $0x78] sm:$0xff] 0.0
        %264 = vst [vmem:[#allocation2 + $0x80] sm:$0xff] 0.0
        %265 = vst [vmem:[#allocation2 + $0x88] sm:$0xff] 0.0
        %266 = vst [vmem:[#allocation2 + $0x90] sm:$0xff] 0.0
        %267 = vst [vmem:[#allocation2 + $0x98] sm:$0xff] 0.0
        %268 = vst [vmem:[#allocation2 + $0xa0] sm:$0xff] 0.0
        %269 = vst [vmem:[#allocation2 + $0xa8] sm:$0xff] 0.0
        %270 = vst [vmem:[#allocation2 + $0xb0] sm:$0xff] 0.0
        %271 = vst [vmem:[#allocation2 + $0xb8] sm:$0xff] 0.0
        %272 = vst [vmem:[#allocation2 + $0xc0] sm:$0xff] 0.0
        %273 = vst [vmem:[#allocation2 + $0xc8] sm:$0xff] 0.0
        %274 = vst [vmem:[#allocation2 + $0xd0] sm:$0xff] 0.0
        %275 = vst [vmem:[#allocation2 + $0xd8] sm:$0xff] 0.0
        %276 = vst [vmem:[#allocation2 + $0xe0] sm:$0xff] 0.0
        %277 = vst [vmem:[#allocation2 + $0xe8] sm:$0xff] 0.0
        %278 = vst [vmem:[#allocation2 + $0xf0] sm:$0xff] 0.0
        %279 = vst [vmem:[#allocation2 + $0xf8] sm:$0xff] 0.0
      $region36: #{rep_n_bottleneck_forward.2} parent=31 // pred_fallthru
        _
      %s280 = smul.u32 %s21, 128
      %v281 = vld [vmem:[#allocation2] sm:$0xff]
      %v282 = vld [vmem:[#allocation2 + $0x8] sm:$0xff]
      %v283 = vld [vmem:[#allocation2 + $0x10] sm:$0xff]
      %v284 = vld [vmem:[#allocation2 + $0x18] sm:$0xff]
      %v285 = vld [vmem:[#allocation2 + $0x20] sm:$0xff]
      %v286 = vld [vmem:[#allocation2 + $0x28] sm:$0xff]
      %v287 = vld [vmem:[#allocation2 + $0x30] sm:$0xff]
      %v288 = vld [vmem:[#allocation2 + $0x38] sm:$0xff]
      %v289 = vld [vmem:[#allocation2 + $0x40] sm:$0xff]
      %v290 = vld [vmem:[#allocation2 + $0x48] sm:$0xff]
      %v291 = vld [vmem:[#allocation2 + $0x50] sm:$0xff]
      %v292 = vld [vmem:[#allocation2 + $0x58] sm:$0xff]
      %v293 = vld [vmem:[#allocation2 + $0x60] sm:$0xff]
      %v294 = vld [vmem:[#allocation2 + $0x68] sm:$0xff]
      %v295 = vld [vmem:[#allocation2 + $0x70] sm:$0xff]
      %v296 = vld [vmem:[#allocation2 + $0x78] sm:$0xff]
      %v297 = vld [vmem:[#allocation2 + $0x80] sm:$0xff]
      %v298 = vld [vmem:[#allocation2 + $0x88] sm:$0xff]
      %v299 = vld [vmem:[#allocation2 + $0x90] sm:$0xff]
      %v300 = vld [vmem:[#allocation2 + $0x98] sm:$0xff]
      %v301 = vld [vmem:[#allocation2 + $0xa0] sm:$0xff]
      %v302 = vld [vmem:[#allocation2 + $0xa8] sm:$0xff]
      %v303 = vld [vmem:[#allocation2 + $0xb0] sm:$0xff]
      %v304 = vld [vmem:[#allocation2 + $0xb8] sm:$0xff]
      %v305 = vld [vmem:[#allocation2 + $0xc0] sm:$0xff]
      %v306 = vld [vmem:[#allocation2 + $0xc8] sm:$0xff]
      %v307 = vld [vmem:[#allocation2 + $0xd0] sm:$0xff]
      %v308 = vld [vmem:[#allocation2 + $0xd8] sm:$0xff]
      %v309 = vld [vmem:[#allocation2 + $0xe0] sm:$0xff]
      %v310 = vld [vmem:[#allocation2 + $0xe8] sm:$0xff]
      %v311 = vld [vmem:[#allocation2 + $0xf0] sm:$0xff]
      %v312 = vld [vmem:[#allocation2 + $0xf8] sm:$0xff]
      %v313 = vld [vmem:[%s225] sm:$0xf]
      %v314 = vld [vmem:[%s225 + $0x4] sm:$0xf]
      %v315 = vld [vmem:[%s225 + $0x8] sm:$0xf]
      %v316 = vld [vmem:[%s225 + $0xc] sm:$0xf]
      %v317 = vld [vmem:[%s225 + $0x10] sm:$0xf]
      %v318 = vld [vmem:[%s225 + $0x14] sm:$0xf]
      %v319 = vld [vmem:[%s225 + $0x18] sm:$0xf]
      %v320 = vld [vmem:[%s225 + $0x1c] sm:$0xf]
      %v321 = vld [vmem:[%s225 + $0x20] sm:$0xf]
      %v322 = vld [vmem:[%s225 + $0x24] sm:$0xf]
      %v323 = vld [vmem:[%s225 + $0x28] sm:$0xf]
      %v324 = vld [vmem:[%s225 + $0x2c] sm:$0xf]
      %v325 = vld [vmem:[%s225 + $0x30] sm:$0xf]
      %v326 = vld [vmem:[%s225 + $0x34] sm:$0xf]
      %v327 = vld [vmem:[%s225 + $0x38] sm:$0xf]
      %v328 = vld [vmem:[%s225 + $0x3c] sm:$0xf]
      %v329 = vld [vmem:[%s225 + $0x40] sm:$0xf]
      %v330 = vld [vmem:[%s225 + $0x44] sm:$0xf]
      %v331 = vld [vmem:[%s225 + $0x48] sm:$0xf]
      %v332 = vld [vmem:[%s225 + $0x4c] sm:$0xf]
      %v333 = vld [vmem:[%s225 + $0x50] sm:$0xf]
      %v334 = vld [vmem:[%s225 + $0x54] sm:$0xf]
      %v335 = vld [vmem:[%s225 + $0x58] sm:$0xf]
      %v336 = vld [vmem:[%s225 + $0x5c] sm:$0xf]
      %v337 = vld [vmem:[%s225 + $0x60] sm:$0xf]
      %v338 = vld [vmem:[%s225 + $0x64] sm:$0xf]
      %v339 = vld [vmem:[%s225 + $0x68] sm:$0xf]
      %v340 = vld [vmem:[%s225 + $0x6c] sm:$0xf]
      %v341 = vld [vmem:[%s225 + $0x70] sm:$0xf]
      %v342 = vld [vmem:[%s225 + $0x74] sm:$0xf]
      %v343 = vld [vmem:[%s225 + $0x78] sm:$0xf]
      %v344 = vld [vmem:[%s225 + $0x7c] sm:$0xf]
      %s345 = sshra.s32 %s280, 3
      %s346 = sand.u32 %s280, 7
      %s347 = smul.addr %s345, 4
      %s348 = scalar_lea.vmem %s230, %s347
      %v349 = vld [vmem:[%s348] sm:$0xf]
      %v350 = vld [vmem:[%s348 + $0x4] sm:$0xf]
      %v351 = vld [vmem:[%s348 + $0x8] sm:$0xf]
      %v352 = vld [vmem:[%s348 + $0xc] sm:$0xf]
      %v353 = vld [vmem:[%s348 + $0x10] sm:$0xf]
      %v354 = vld [vmem:[%s348 + $0x14] sm:$0xf]
      %v355 = vld [vmem:[%s348 + $0x18] sm:$0xf]
      %v356 = vld [vmem:[%s348 + $0x1c] sm:$0xf]
      %v357 = vld [vmem:[%s348 + $0x20] sm:$0xf]
      %v358 = vld [vmem:[%s348 + $0x24] sm:$0xf]
      %v359 = vld [vmem:[%s348 + $0x28] sm:$0xf]
      %v360 = vld [vmem:[%s348 + $0x2c] sm:$0xf]
      %v361 = vld [vmem:[%s348 + $0x30] sm:$0xf]
      %v362 = vld [vmem:[%s348 + $0x34] sm:$0xf]
      %v363 = vld [vmem:[%s348 + $0x38] sm:$0xf]
      %v364 = vld [vmem:[%s348 + $0x3c] sm:$0xf]
      %v397 = vunpack.c.l.b16 %v313
      %v398 = vunpack.c.l.b16 %v314
      %v399 = vunpack.c.l.b16 %v315
      %v400 = vunpack.c.l.b16 %v316
      %v401 = vunpack.c.l.b16 %v317
      %v402 = vunpack.c.l.b16 %v318
      %v403 = vunpack.c.l.b16 %v319
      %v404 = vunpack.c.l.b16 %v320
      %v405 = vunpack.c.l.b16 %v321
      %v406 = vunpack.c.l.b16 %v322
      %v407 = vunpack.c.l.b16 %v323
      %v408 = vunpack.c.l.b16 %v324
      %v409 = vunpack.c.l.b16 %v325
      %v410 = vunpack.c.l.b16 %v326
      %v411 = vunpack.c.l.b16 %v327
      %v412 = vunpack.c.l.b16 %v328
      %v413 = vunpack.c.l.b16 %v329
      %v414 = vunpack.c.l.b16 %v330
      %v415 = vunpack.c.l.b16 %v331
      %v416 = vunpack.c.l.b16 %v332
      %v417 = vunpack.c.l.b16 %v333
      %v418 = vunpack.c.l.b16 %v334
      %v419 = vunpack.c.l.b16 %v335
      %v420 = vunpack.c.l.b16 %v336
      %v421 = vunpack.c.l.b16 %v337
      %v422 = vunpack.c.l.b16 %v338
      %v423 = vunpack.c.l.b16 %v339
      %v424 = vunpack.c.l.b16 %v340
      %v425 = vunpack.c.l.b16 %v341
      %v426 = vunpack.c.l.b16 %v342
      %v427 = vunpack.c.l.b16 %v343
      %v428 = vunpack.c.l.b16 %v344
      %v429 = vpack.c.b16 %v398, %v397
      %v430 = vpack.c.b16 %v400, %v399
      %v431 = vpack.c.b16 %v402, %v401
      %v432 = vpack.c.b16 %v404, %v403
      %v433 = vpack.c.b16 %v406, %v405
      %v434 = vpack.c.b16 %v408, %v407
      %v435 = vpack.c.b16 %v410, %v409
      %v436 = vpack.c.b16 %v412, %v411
      %v437 = vpack.c.b16 %v414, %v413
      %v438 = vpack.c.b16 %v416, %v415
      %v439 = vpack.c.b16 %v418, %v417
      %v440 = vpack.c.b16 %v420, %v419
      %v441 = vpack.c.b16 %v422, %v421
      %v442 = vpack.c.b16 %v424, %v423
      %v443 = vpack.c.b16 %v426, %v425
      %v444 = vpack.c.b16 %v428, %v427
      %v477 = vunpack.c.l.b16 %v349
      %v478 = vunpack.c.l.b16 %v350
      %v479 = vunpack.c.l.b16 %v351
      %v480 = vunpack.c.l.b16 %v352
      %v481 = vunpack.c.l.b16 %v353
      %v482 = vunpack.c.l.b16 %v354
      %v483 = vunpack.c.l.b16 %v355
      %v484 = vunpack.c.l.b16 %v356
      %v485 = vunpack.c.l.b16 %v357
      %v486 = vunpack.c.l.b16 %v358
      %v487 = vunpack.c.l.b16 %v359
      %v488 = vunpack.c.l.b16 %v360
      %v489 = vunpack.c.l.b16 %v361
      %v490 = vunpack.c.l.b16 %v362
      %v491 = vunpack.c.l.b16 %v363
      %v492 = vunpack.c.l.b16 %v364
      %v493 = vpack.c.b16 %v478, %v477
      %v494 = vpack.c.b16 %v480, %v479
      %v495 = vpack.c.b16 %v482, %v481
      %v496 = vpack.c.b16 %v484, %v483
      %v497 = vpack.c.b16 %v486, %v485
      %v498 = vpack.c.b16 %v488, %v487
      %v499 = vpack.c.b16 %v490, %v489
      %v500 = vpack.c.b16 %v492, %v491
      %509 = vmatprep.subr.bf16.mxu0 0
      %510 = vmatpush1.bf16.msra.mxu0 %v493
      %511 = vmatprep.subr.bf16.mxu0 0
      %512 = vmatpush1.bf16.msra.mxu0 %v494
      %513 = vmatprep.subr.bf16.mxu0 0
      %514 = vmatpush1.bf16.msra.mxu0 %v495
      %515 = vmatprep.subr.bf16.mxu0 0
      %516 = vmatpush1.bf16.msra.mxu0 %v496
      %517 = vmatprep.subr.bf16.mxu0 0
      %518 = vmatpush1.bf16.msra.mxu0 %v497
      %519 = vmatprep.subr.bf16.mxu0 0
      %520 = vmatpush1.bf16.msra.mxu0 %v498
      %521 = vmatprep.subr.bf16.mxu0 0
      %522 = vmatpush1.bf16.msra.mxu0 %v499
      %523 = vmatprep.subr.bf16.mxu0 0
      %524 = vmatpush1.bf16.msra.mxu0 %v500
      %525 = vmatprep.subr.bf16.mxu0 0
      %526 = vmatpush1.bf16.msra.mxu0 0
      %527 = vmatprep.subr.bf16.mxu0 0
      %528 = vmatpush1.bf16.msra.mxu0 0
      %529 = vmatprep.subr.bf16.mxu0 0
      %530 = vmatpush1.bf16.msra.mxu0 0
      %531 = vmatprep.subr.bf16.mxu0 0
      %532 = vmatpush1.bf16.msra.mxu0 0
      %533 = vmatprep.subr.bf16.mxu0 0
      %534 = vmatpush1.bf16.msra.mxu0 0
      %535 = vmatprep.subr.bf16.mxu0 0
      %536 = vmatpush1.bf16.msra.mxu0 0
      %537 = vmatprep.subr.bf16.mxu0 0
      %538 = vmatpush1.bf16.msra.mxu0 0
      %539 = vmatprep.subr.bf16.mxu0 0
      %540 = vmatpush1.bf16.msra.mxu0 0
      %541 = vmatprep.mubr.bf16.mxu0 0
      %542 = vmatmul.mubr.bf16.gmra.mrb[0].mxu0 %v429
      %v543 = vpop.f32.mrb[0].mxu0
      %v544 = vadd.f32 0.0, %v543
      %v545 = vpop.f32.mrb[0].mxu0
      %v546 = vpop.f32.mrb[0].mxu0
      %v547 = vadd.f32 0.0, %v546
      %v548 = vpop.f32.mrb[0].mxu0
      %549 = vmatprep.mubr.bf16.mxu0 0
      %550 = vmatmul.mubr.bf16.gmra.mrb[0].mxu0 %v430
      %v551 = vpop.f32.mrb[0].mxu0
      %v552 = vadd.f32 0.0, %v551
      %v553 = vpop.f32.mrb[0].mxu0
      %v554 = vpop.f32.mrb[0].mxu0
      %v555 = vadd.f32 0.0, %v554
      %v556 = vpop.f32.mrb[0].mxu0
      %557 = vmatprep.mubr.bf16.mxu0 0
      %558 = vmatmul.mubr.bf16.gmra.mrb[0].mxu0 %v431
      %v559 = vpop.f32.mrb[0].mxu0
      %v560 = vadd.f32 0.0, %v559
      %v561 = vpop.f32.mrb[0].mxu0
      %v562 = vpop.f32.mrb[0].mxu0
      %v563 = vadd.f32 0.0, %v562
      %v564 = vpop.f32.mrb[0].mxu0
      %565 = vmatprep.mubr.bf16.mxu0 0
      %566 = vmatmul.mubr.bf16.gmra.mrb[0].mxu0 %v432
      %v567 = vpop.f32.mrb[0].mxu0
      %v568 = vadd.f32 0.0, %v567
      %v569 = vpop.f32.mrb[0].mxu0
      %v570 = vpop.f32.mrb[0].mxu0
      %v571 = vadd.f32 0.0, %v570
      %v572 = vpop.f32.mrb[0].mxu0
      %573 = vmatprep.mubr.bf16.mxu0 0
      %574 = vmatmul.mubr.bf16.gmra.mrb[0].mxu0 %v433
      %v575 = vpop.f32.mrb[0].mxu0
      %v576 = vadd.f32 0.0, %v575
      %v577 = vpop.f32.mrb[0].mxu0
      %v578 = vpop.f32.mrb[0].mxu0
      %v579 = vadd.f32 0.0, %v578
      %v580 = vpop.f32.mrb[0].mxu0
      %581 = vmatprep.mubr.bf16.mxu0 0
      %582 = vmatmul.mubr.bf16.gmra.mrb[0].mxu0 %v434
      %v583 = vpop.f32.mrb[0].mxu0
      %v584 = vadd.f32 0.0, %v583
      %v585 = vpop.f32.mrb[0].mxu0
      %v586 = vpop.f32.mrb[0].mxu0
      %v587 = vadd.f32 0.0, %v586
      %v588 = vpop.f32.mrb[0].mxu0
      %589 = vmatprep.mubr.bf16.mxu0 0
      %590 = vmatmul.mubr.bf16.gmra.mrb[0].mxu0 %v435
      %v591 = vpop.f32.mrb[0].mxu0
      %v592 = vadd.f32 0.0, %v591
      %v593 = vpop.f32.mrb[0].mxu0
      %v594 = vpop.f32.mrb[0].mxu0
      %v595 = vadd.f32 0.0, %v594
      %v596 = vpop.f32.mrb[0].mxu0
      %597 = vmatprep.mubr.bf16.mxu0 0
      %598 = vmatmul.mubr.bf16.gmra.mrb[0].mxu0 %v436
      %v599 = vpop.f32.mrb[0].mxu0
      %v600 = vadd.f32 0.0, %v599
      %v601 = vpop.f32.mrb[0].mxu0
      %v602 = vpop.f32.mrb[0].mxu0
      %v603 = vadd.f32 0.0, %v602
      %v604 = vpop.f32.mrb[0].mxu0
      %605 = vmatprep.mubr.bf16.mxu0 0
      %606 = vmatmul.mubr.bf16.gmra.mrb[0].mxu0 %v437
      %v607 = vpop.f32.mrb[0].mxu0
      %v608 = vadd.f32 0.0, %v607
      %v609 = vpop.f32.mrb[0].mxu0
      %v610 = vpop.f32.mrb[0].mxu0
      %v611 = vadd.f32 0.0, %v610
      %v612 = vpop.f32.mrb[0].mxu0
      %613 = vmatprep.mubr.bf16.mxu0 0
      %614 = vmatmul.mubr.bf16.gmra.mrb[0].mxu0 %v438
      %v615 = vpop.f32.mrb[0].mxu0
      %v616 = vadd.f32 0.0, %v615
      %v617 = vpop.f32.mrb[0].mxu0
      %v618 = vpop.f32.mrb[0].mxu0
      %v619 = vadd.f32 0.0, %v618
      %v620 = vpop.f32.mrb[0].mxu0
      %621 = vmatprep.mubr.bf16.mxu0 0
      %622 = vmatmul.mubr.bf16.gmra.mrb[0].mxu0 %v439
      %v623 = vpop.f32.mrb[0].mxu0
      %v624 = vadd.f32 0.0, %v623
      %v625 = vpop.f32.mrb[0].mxu0
      %v626 = vpop.f32.mrb[0].mxu0
      %v627 = vadd.f32 0.0, %v626
      %v628 = vpop.f32.mrb[0].mxu0
      %629 = vmatprep.mubr.bf16.mxu0 0
      %630 = vmatmul.mubr.bf16.gmra.mrb[0].mxu0 %v440
      %v631 = vpop.f32.mrb[0].mxu0
      %v632 = vadd.f32 0.0, %v631
      %v633 = vpop.f32.mrb[0].mxu0
      %v634 = vpop.f32.mrb[0].mxu0
      %v635 = vadd.f32 0.0, %v634
      %v636 = vpop.f32.mrb[0].mxu0
      %637 = vmatprep.mubr.bf16.mxu0 0
      %638 = vmatmul.mubr.bf16.gmra.mrb[0].mxu0 %v441
      %v639 = vpop.f32.mrb[0].mxu0
      %v640 = vadd.f32 0.0, %v639
      %v641 = vpop.f32.mrb[0].mxu0
      %v642 = vpop.f32.mrb[0].mxu0
      %v643 = vadd.f32 0.0, %v642
      %v644 = vpop.f32.mrb[0].mxu0
      %645 = vmatprep.mubr.bf16.mxu0 0
      %646 = vmatmul.mubr.bf16.gmra.mrb[0].mxu0 %v442
      %v647 = vpop.f32.mrb[0].mxu0
      %v648 = vadd.f32 0.0, %v647
      %v649 = vpop.f32.mrb[0].mxu0
      %v650 = vpop.f32.mrb[0].mxu0
      %v651 = vadd.f32 0.0, %v650
      %v652 = vpop.f32.mrb[0].mxu0
      %653 = vmatprep.mubr.bf16.mxu0 0
      %654 = vmatmul.mubr.bf16.gmra.mrb[0].mxu0 %v443
      %v655 = vpop.f32.mrb[0].mxu0
      %v656 = vadd.f32 0.0, %v655
      %v657 = vpop.f32.mrb[0].mxu0
      %v658 = vpop.f32.mrb[0].mxu0
      %v659 = vadd.f32 0.0, %v658
      %v660 = vpop.f32.mrb[0].mxu0
      %661 = vmatprep.mubr.bf16.mxu0 0
      %662 = vmatmul.mubr.bf16.gmra.mrb[0].mxu0 %v444
      %v663 = vpop.f32.mrb[0].mxu0
      %v664 = vadd.f32 0.0, %v663
      %v665 = vpop.f32.mrb[0].mxu0
      %v666 = vpop.f32.mrb[0].mxu0
      %v667 = vadd.f32 0.0, %v666
      %v668 = vpop.f32.mrb[0].mxu0
      %669 = vdwg.mxu0
      %v670 = vadd.f32 %v281, %v544
      %v671 = vadd.f32 %v282, %v547
      %v672 = vadd.f32 %v283, %v552
      %v673 = vadd.f32 %v284, %v555
      %v674 = vadd.f32 %v285, %v560
      %v675 = vadd.f32 %v286, %v563
      %v676 = vadd.f32 %v287, %v568
      %v677 = vadd.f32 %v288, %v571
      %v678 = vadd.f32 %v289, %v576
      %v679 = vadd.f32 %v290, %v579
      %v680 = vadd.f32 %v291, %v584
      %v681 = vadd.f32 %v292, %v587
      %v682 = vadd.f32 %v293, %v592
      %v683 = vadd.f32 %v294, %v595
      %v684 = vadd.f32 %v295, %v600
      %v685 = vadd.f32 %v296, %v603
      %v686 = vadd.f32 %v297, %v608
      %v687 = vadd.f32 %v298, %v611
      %v688 = vadd.f32 %v299, %v616
      %v689 = vadd.f32 %v300, %v619
      %v690 = vadd.f32 %v301, %v624
      %v691 = vadd.f32 %v302, %v627
      %v692 = vadd.f32 %v303, %v632
      %v693 = vadd.f32 %v304, %v635
      %v694 = vadd.f32 %v305, %v640
      %v695 = vadd.f32 %v306, %v643
      %v696 = vadd.f32 %v307, %v648
      %v697 = vadd.f32 %v308, %v651
      %v698 = vadd.f32 %v309, %v656
      %v699 = vadd.f32 %v310, %v659
      %v700 = vadd.f32 %v311, %v664
      %v701 = vadd.f32 %v312, %v667
      %702 = vst [vmem:[#allocation2] sm:$0xff] %v670
      %703 = vst [vmem:[#allocation2 + $0x8] sm:$0xff] %v671
      %704 = vst [vmem:[#allocation2 + $0x10] sm:$0xff] %v672
      %705 = vst [vmem:[#allocation2 + $0x18] sm:$0xff] %v673
      %706 = vst [vmem:[#allocation2 + $0x20] sm:$0xff] %v674
      %707 = vst [vmem:[#allocation2 + $0x28] sm:$0xff] %v675
      %708 = vst [vmem:[#allocation2 + $0x30] sm:$0xff] %v676
      %709 = vst [vmem:[#allocation2 + $0x38] sm:$0xff] %v677
      %710 = vst [vmem:[#allocation2 + $0x40] sm:$0xff] %v678
      %711 = vst [vmem:[#allocation2 + $0x48] sm:$0xff] %v679
      %712 = vst [vmem:[#allocation2 + $0x50] sm:$0xff] %v680
      %713 = vst [vmem:[#allocation2 + $0x58] sm:$0xff] %v681
      %714 = vst [vmem:[#allocation2 + $0x60] sm:$0xff] %v682
      %715 = vst [vmem:[#allocation2 + $0x68] sm:$0xff] %v683
      %716 = vst [vmem:[#allocation2 + $0x70] sm:$0xff] %v684
      %717 = vst [vmem:[#allocation2 + $0x78] sm:$0xff] %v685
      %718 = vst [vmem:[#allocation2 + $0x80] sm:$0xff] %v686
      %719 = vst [vmem:[#allocation2 + $0x88] sm:$0xff] %v687
      %720 = vst [vmem:[#allocation2 + $0x90] sm:$0xff] %v688
      %721 = vst [vmem:[#allocation2 + $0x98] sm:$0xff] %v689
      %722 = vst [vmem:[#allocation2 + $0xa0] sm:$0xff] %v690
      %723 = vst [vmem:[#allocation2 + $0xa8] sm:$0xff] %v691
      %724 = vst [vmem:[#allocation2 + $0xb0] sm:$0xff] %v692
      %725 = vst [vmem:[#allocation2 + $0xb8] sm:$0xff] %v693
      %726 = vst [vmem:[#allocation2 + $0xc0] sm:$0xff] %v694
      %727 = vst [vmem:[#allocation2 + $0xc8] sm:$0xff] %v695
      %728 = vst [vmem:[#allocation2 + $0xd0] sm:$0xff] %v696
      %729 = vst [vmem:[#allocation2 + $0xd8] sm:$0xff] %v697
      %730 = vst [vmem:[#allocation2 + $0xe0] sm:$0xff] %v698
      %731 = vst [vmem:[#allocation2 + $0xe8] sm:$0xff] %v699
      %732 = vst [vmem:[#allocation2 + $0xf0] sm:$0xff] %v700
      %733 = vst [vmem:[#allocation2 + $0xf8] sm:$0xff] %v701
      // Predicated region
      $region37: #{rep_n_bottleneck_forward.2} parent=31 // pred_check
        %p734 = pneg %p244
      $region38: #{rep_n_bottleneck_forward.2} parent=31 // pred_check_branch
        %736 = sbr.rel (%p734) target = $region40
      $region39: #{rep_n_bottleneck_forward.2} parent=31 // pred_region
        %v737 = vld [vmem:[#allocation2] sm:$0xff]
        %v738 = vld [vmem:[#allocation2 + $0x8] sm:$0xff]
        %v739 = vld [vmem:[#allocation2 + $0x10] sm:$0xff]
        %v740 = vld [vmem:[#allocation2 + $0x18] sm:$0xff]
        %v741 = vld [vmem:[#allocation2 + $0x20] sm:$0xff]
        %v742 = vld [vmem:[#allocation2 + $0x28] sm:$0xff]
        %v743 = vld [vmem:[#allocation2 + $0x30] sm:$0xff]
        %v744 = vld [vmem:[#allocation2 + $0x38] sm:$0xff]
        %v745 = vld [vmem:[#allocation2 + $0x40] sm:$0xff]
        %v746 = vld [vmem:[#allocation2 + $0x48] sm:$0xff]
        %v747 = vld [vmem:[#allocation2 + $0x50] sm:$0xff]
        %v748 = vld [vmem:[#allocation2 + $0x58] sm:$0xff]
        %v749 = vld [vmem:[#allocation2 + $0x60] sm:$0xff]
        %v750 = vld [vmem:[#allocation2 + $0x68] sm:$0xff]
        %v751 = vld [vmem:[#allocation2 + $0x70] sm:$0xff]
        %v752 = vld [vmem:[#allocation2 + $0x78] sm:$0xff]
        %v753 = vld [vmem:[#allocation2 + $0x80] sm:$0xff]
        %v754 = vld [vmem:[#allocation2 + $0x88] sm:$0xff]
        %v755 = vld [vmem:[#allocation2 + $0x90] sm:$0xff]
        %v756 = vld [vmem:[#allocation2 + $0x98] sm:$0xff]
        %v757 = vld [vmem:[#allocation2 + $0xa0] sm:$0xff]
        %v758 = vld [vmem:[#allocation2 + $0xa8] sm:$0xff]
        %v759 = vld [vmem:[#allocation2 + $0xb0] sm:$0xff]
        %v760 = vld [vmem:[#allocation2 + $0xb8] sm:$0xff]
        %v761 = vld [vmem:[#allocation2 + $0xc0] sm:$0xff]
        %v762 = vld [vmem:[#allocation2 + $0xc8] sm:$0xff]
        %v763 = vld [vmem:[#allocation2 + $0xd0] sm:$0xff]
        %v764 = vld [vmem:[#allocation2 + $0xd8] sm:$0xff]
        %v765 = vld [vmem:[#allocation2 + $0xe0] sm:$0xff]
        %v766 = vld [vmem:[#allocation2 + $0xe8] sm:$0xff]
        %v767 = vld [vmem:[#allocation2 + $0xf0] sm:$0xff]
        %v768 = vld [vmem:[#allocation2 + $0xf8] sm:$0xff]
        %v769 = vld [vmem:[%s233] sm:$0x1]
        %v771 = vlaneseq
        %v772 = vshrl.u32 %v771, 7
        %v773 = vsub.s32 0, %v772
        %v774 = vrot.slane %v769, %v773
        %v776 = vadd.f32 %v737, %v774
        %v777 = vadd.f32 %v738, %v774
        %v778 = vadd.f32 %v739, %v774
        %v779 = vadd.f32 %v740, %v774
        %v780 = vadd.f32 %v741, %v774
        %v781 = vadd.f32 %v742, %v774
        %v782 = vadd.f32 %v743, %v774
        %v783 = vadd.f32 %v744, %v774
        %v784 = vadd.f32 %v745, %v774
        %v785 = vadd.f32 %v746, %v774
        %v786 = vadd.f32 %v747, %v774
        %v787 = vadd.f32 %v748, %v774
        %v788 = vadd.f32 %v749, %v774
        %v789 = vadd.f32 %v750, %v774
        %v790 = vadd.f32 %v751, %v774
        %v791 = vadd.f32 %v752, %v774
        %v792 = vadd.f32 %v753, %v774
        %v793 = vadd.f32 %v754, %v774
        %v794 = vadd.f32 %v755, %v774
        %v795 = vadd.f32 %v756, %v774
        %v796 = vadd.f32 %v757, %v774
        %v797 = vadd.f32 %v758, %v774
        %v798 = vadd.f32 %v759, %v774
        %v799 = vadd.f32 %v760, %v774
        %v800 = vadd.f32 %v761, %v774
        %v801 = vadd.f32 %v762, %v774
        %v802 = vadd.f32 %v763, %v774
        %v803 = vadd.f32 %v764, %v774
        %v804 = vadd.f32 %v765, %v774
        %v805 = vadd.f32 %v766, %v774
        %v806 = vadd.f32 %v767, %v774
        %v807 = vadd.f32 %v768, %v774
        %v808 = vsub.f32 0.0, %v776
        %v809 = vsub.f32 0.0, %v777
        %v810 = vsub.f32 0.0, %v778
        %v811 = vsub.f32 0.0, %v779
        %v812 = vsub.f32 0.0, %v780
        %v813 = vsub.f32 0.0, %v781
        %v814 = vsub.f32 0.0, %v782
        %v815 = vsub.f32 0.0, %v783
        %v816 = vsub.f32 0.0, %v784
        %v817 = vsub.f32 0.0, %v785
        %v818 = vsub.f32 0.0, %v786
        %v819 = vsub.f32 0.0, %v787
        %v820 = vsub.f32 0.0, %v788
        %v821 = vsub.f32 0.0, %v789
        %v822 = vsub.f32 0.0, %v790
        %v823 = vsub.f32 0.0, %v791
        %v824 = vsub.f32 0.0, %v792
        %v825 = vsub.f32 0.0, %v793
        %v826 = vsub.f32 0.0, %v794
        %v827 = vsub.f32 0.0, %v795
        %v828 = vsub.f32 0.0, %v796
        %v829 = vsub.f32 0.0, %v797
        %v830 = vsub.f32 0.0, %v798
        %v831 = vsub.f32 0.0, %v799
        %v832 = vsub.f32 0.0, %v800
        %v833 = vsub.f32 0.0, %v801
        %v834 = vsub.f32 0.0, %v802
        %v835 = vsub.f32 0.0, %v803
        %v836 = vsub.f32 0.0, %v804
        %v837 = vsub.f32 0.0, %v805
        %v838 = vsub.f32 0.0, %v806
        %v839 = vsub.f32 0.0, %v807
        %v840 = vmul.f32 %v808, 1.442695
        %v841 = vpow.pop %v840
        %v842 = vmul.f32 %v809, 1.442695
        %v843 = vpow.pop %v842
        %v844 = vmul.f32 %v810, 1.442695
        %v845 = vpow.pop %v844
        %v846 = vmul.f32 %v811, 1.442695
        %v847 = vpow.pop %v846
        %v848 = vmul.f32 %v812, 1.442695
        %v849 = vpow.pop %v848
        %v850 = vmul.f32 %v813, 1.442695
        %v851 = vpow.pop %v850
        %v852 = vmul.f32 %v814, 1.442695
        %v853 = vpow.pop %v852
        %v854 = vmul.f32 %v815, 1.442695
        %v855 = vpow.pop %v854
        %v856 = vmul.f32 %v816, 1.442695
        %v857 = vpow.pop %v856
        %v858 = vmul.f32 %v817, 1.442695
        %v859 = vpow.pop %v858
        %v860 = vmul.f32 %v818, 1.442695
        %v861 = vpow.pop %v860
        %v862 = vmul.f32 %v819, 1.442695
        %v863 = vpow.pop %v862
        %v864 = vmul.f32 %v820, 1.442695
        %v865 = vpow.pop %v864
        %v866 = vmul.f32 %v821, 1.442695
        %v867 = vpow.pop %v866
        %v868 = vmul.f32 %v822, 1.442695
        %v869 = vpow.pop %v868
        %v870 = vmul.f32 %v823, 1.442695
        %v871 = vpow.pop %v870
        %v872 = vmul.f32 %v824, 1.442695
        %v873 = vpow.pop %v872
        %v874 = vmul.f32 %v825, 1.442695
        %v875 = vpow.pop %v874
        %v876 = vmul.f32 %v826, 1.442695
        %v877 = vpow.pop %v876
        %v878 = vmul.f32 %v827, 1.442695
        %v879 = vpow.pop %v878
        %v880 = vmul.f32 %v828, 1.442695
        %v881 = vpow.pop %v880
        %v882 = vmul.f32 %v829, 1.442695
        %v883 = vpow.pop %v882
        %v884 = vmul.f32 %v830, 1.442695
        %v885 = vpow.pop %v884
        %v886 = vmul.f32 %v831, 1.442695
        %v887 = vpow.pop %v886
        %v888 = vmul.f32 %v832, 1.442695
        %v889 = vpow.pop %v888
        %v890 = vmul.f32 %v833, 1.442695
        %v891 = vpow.pop %v890
        %v892 = vmul.f32 %v834, 1.442695
        %v893 = vpow.pop %v892
        %v894 = vmul.f32 %v835, 1.442695
        %v895 = vpow.pop %v894
        %v896 = vmul.f32 %v836, 1.442695
        %v897 = vpow.pop %v896
        %v898 = vmul.f32 %v837, 1.442695
        %v899 = vpow.pop %v898
        %v900 = vmul.f32 %v838, 1.442695
        %v901 = vpow.pop %v900
        %v902 = vmul.f32 %v839, 1.442695
        %v903 = vpow.pop %v902
        %v904 = vadd.f32 %v841, 1.0
        %v905 = vadd.f32 %v843, 1.0
        %v906 = vadd.f32 %v845, 1.0
        %v907 = vadd.f32 %v847, 1.0
        %v908 = vadd.f32 %v849, 1.0
        %v909 = vadd.f32 %v851, 1.0
        %v910 = vadd.f32 %v853, 1.0
        %v911 = vadd.f32 %v855, 1.0
        %v912 = vadd.f32 %v857, 1.0
        %v913 = vadd.f32 %v859, 1.0
        %v914 = vadd.f32 %v861, 1.0
        %v915 = vadd.f32 %v863, 1.0
        %v916 = vadd.f32 %v865, 1.0
        %v917 = vadd.f32 %v867, 1.0
        %v918 = vadd.f32 %v869, 1.0
        %v919 = vadd.f32 %v871, 1.0
        %v920 = vadd.f32 %v873, 1.0
        %v921 = vadd.f32 %v875, 1.0
        %v922 = vadd.f32 %v877, 1.0
        %v923 = vadd.f32 %v879, 1.0
        %v924 = vadd.f32 %v881, 1.0
        %v925 = vadd.f32 %v883, 1.0
        %v926 = vadd.f32 %v885, 1.0
        %v927 = vadd.f32 %v887, 1.0
        %v928 = vadd.f32 %v889, 1.0
        %v929 = vadd.f32 %v891, 1.0
        %v930 = vadd.f32 %v893, 1.0
        %v931 = vadd.f32 %v895, 1.0
        %v932 = vadd.f32 %v897, 1.0
        %v933 = vadd.f32 %v899, 1.0
        %v934 = vadd.f32 %v901, 1.0
        %v935 = vadd.f32 %v903, 1.0
        %v936 = vrcp.pop %v904
        %v937 = vrcp.pop %v905
        %v938 = vrcp.pop %v906
        %v939 = vrcp.pop %v907
        %v940 = vrcp.pop %v908
        %v941 = vrcp.pop %v909
        %v942 = vrcp.pop %v910
        %v943 = vrcp.pop %v911
        %v944 = vrcp.pop %v912
        %v945 = vrcp.pop %v913
        %v946 = vrcp.pop %v914
        %v947 = vrcp.pop %v915
        %v948 = vrcp.pop %v916
        %v949 = vrcp.pop %v917
        %v950 = vrcp.pop %v918
        %v951 = vrcp.pop %v919
        %v952 = vrcp.pop %v920
        %v953 = vrcp.pop %v921
        %v954 = vrcp.pop %v922
        %v955 = vrcp.pop %v923
        %v956 = vrcp.pop %v924
        %v957 = vrcp.pop %v925
        %v958 = vrcp.pop %v926
        %v959 = vrcp.pop %v927
        %v960 = vrcp.pop %v928
        %v961 = vrcp.pop %v929
        %v962 = vrcp.pop %v930
        %v963 = vrcp.pop %v931
        %v964 = vrcp.pop %v932
        %v965 = vrcp.pop %v933
        %v966 = vrcp.pop %v934
        %v967 = vrcp.pop %v935
        %v968 = vmul.f32 %v776, %v936
        %v969 = vmul.f32 %v777, %v937
        %v970 = vmul.f32 %v778, %v938
        %v971 = vmul.f32 %v779, %v939
        %v972 = vmul.f32 %v780, %v940
        %v973 = vmul.f32 %v781, %v941
        %v974 = vmul.f32 %v782, %v942
        %v975 = vmul.f32 %v783, %v943
        %v976 = vmul.f32 %v784, %v944
        %v977 = vmul.f32 %v785, %v945
        %v978 = vmul.f32 %v786, %v946
        %v979 = vmul.f32 %v787, %v947
        %v980 = vmul.f32 %v788, %v948
        %v981 = vmul.f32 %v789, %v949
        %v982 = vmul.f32 %v790, %v950
        %v983 = vmul.f32 %v791, %v951
        %v984 = vmul.f32 %v792, %v952
        %v985 = vmul.f32 %v793, %v953
        %v986 = vmul.f32 %v794, %v954
        %v987 = vmul.f32 %v795, %v955
        %v988 = vmul.f32 %v796, %v956
        %v989 = vmul.f32 %v797, %v957
        %v990 = vmul.f32 %v798, %v958
        %v991 = vmul.f32 %v799, %v959
        %v992 = vmul.f32 %v800, %v960
        %v993 = vmul.f32 %v801, %v961
        %v994 = vmul.f32 %v802, %v962
        %v995 = vmul.f32 %v803, %v963
        %v996 = vmul.f32 %v804, %v964
        %v997 = vmul.f32 %v805, %v965
        %v998 = vmul.f32 %v806, %v966
        %v999 = vmul.f32 %v807, %v967
        %v1000 = vpack.c.bf16 %v969, %v968
        %v1001 = vpack.c.bf16 %v971, %v970
        %v1002 = vpack.c.bf16 %v973, %v972
        %v1003 = vpack.c.bf16 %v975, %v974
        %v1004 = vpack.c.bf16 %v977, %v976
        %v1005 = vpack.c.bf16 %v979, %v978
        %v1006 = vpack.c.bf16 %v981, %v980
        %v1007 = vpack.c.bf16 %v983, %v982
        %v1008 = vpack.c.bf16 %v985, %v984
        %v1009 = vpack.c.bf16 %v987, %v986
        %v1010 = vpack.c.bf16 %v989, %v988
        %v1011 = vpack.c.bf16 %v991, %v990
        %v1012 = vpack.c.bf16 %v993, %v992
        %v1013 = vpack.c.bf16 %v995, %v994
        %v1014 = vpack.c.bf16 %v997, %v996
        %v1015 = vpack.c.bf16 %v999, %v998
        %v1032 = vunpack.c.l.b16 %v1000
        %v1033 = vunpack.c.h.b16 %v1000
        %v1034 = vunpack.c.l.b16 %v1001
        %v1035 = vunpack.c.h.b16 %v1001
        %v1036 = vunpack.c.l.b16 %v1002
        %v1037 = vunpack.c.h.b16 %v1002
        %v1038 = vunpack.c.l.b16 %v1003
        %v1039 = vunpack.c.h.b16 %v1003
        %v1040 = vunpack.c.l.b16 %v1004
        %v1041 = vunpack.c.h.b16 %v1004
        %v1042 = vunpack.c.l.b16 %v1005
        %v1043 = vunpack.c.h.b16 %v1005
        %v1044 = vunpack.c.l.b16 %v1006
        %v1045 = vunpack.c.h.b16 %v1006
        %v1046 = vunpack.c.l.b16 %v1007
        %v1047 = vunpack.c.h.b16 %v1007
        %v1048 = vunpack.c.l.b16 %v1008
        %v1049 = vunpack.c.h.b16 %v1008
        %v1050 = vunpack.c.l.b16 %v1009
        %v1051 = vunpack.c.h.b16 %v1009
        %v1052 = vunpack.c.l.b16 %v1010
        %v1053 = vunpack.c.h.b16 %v1010
        %v1054 = vunpack.c.l.b16 %v1011
        %v1055 = vunpack.c.h.b16 %v1011
        %v1056 = vunpack.c.l.b16 %v1012
        %v1057 = vunpack.c.h.b16 %v1012
        %v1058 = vunpack.c.l.b16 %v1013
        %v1059 = vunpack.c.h.b16 %v1013
        %v1060 = vunpack.c.l.b16 %v1014
        %v1061 = vunpack.c.h.b16 %v1014
        %v1062 = vunpack.c.l.b16 %v1015
        %v1063 = vunpack.c.h.b16 %v1015
        %v1064 = vpack.c.b16 %v1032, %v1032
        %v1065 = vpack.c.b16 %v1033, %v1033
        %v1066 = vpack.c.b16 %v1034, %v1034
        %v1067 = vpack.c.b16 %v1035, %v1035
        %v1068 = vpack.c.b16 %v1036, %v1036
        %v1069 = vpack.c.b16 %v1037, %v1037
        %v1070 = vpack.c.b16 %v1038, %v1038
        %v1071 = vpack.c.b16 %v1039, %v1039
        %v1072 = vpack.c.b16 %v1040, %v1040
        %v1073 = vpack.c.b16 %v1041, %v1041
        %v1074 = vpack.c.b16 %v1042, %v1042
        %v1075 = vpack.c.b16 %v1043, %v1043
        %v1076 = vpack.c.b16 %v1044, %v1044
        %v1077 = vpack.c.b16 %v1045, %v1045
        %v1078 = vpack.c.b16 %v1046, %v1046
        %v1079 = vpack.c.b16 %v1047, %v1047
        %v1080 = vpack.c.b16 %v1048, %v1048
        %v1081 = vpack.c.b16 %v1049, %v1049
        %v1082 = vpack.c.b16 %v1050, %v1050
        %v1083 = vpack.c.b16 %v1051, %v1051
        %v1084 = vpack.c.b16 %v1052, %v1052
        %v1085 = vpack.c.b16 %v1053, %v1053
        %v1086 = vpack.c.b16 %v1054, %v1054
        %v1087 = vpack.c.b16 %v1055, %v1055
        %v1088 = vpack.c.b16 %v1056, %v1056
        %v1089 = vpack.c.b16 %v1057, %v1057
        %v1090 = vpack.c.b16 %v1058, %v1058
        %v1091 = vpack.c.b16 %v1059, %v1059
        %v1092 = vpack.c.b16 %v1060, %v1060
        %v1093 = vpack.c.b16 %v1061, %v1061
        %v1094 = vpack.c.b16 %v1062, %v1062
        %v1095 = vpack.c.b16 %v1063, %v1063
        %1128 = vst [vmem:[%s241] sm:$0xf] %v1064
        %1129 = vst [vmem:[%s241 + $0x4] sm:$0xf] %v1065
        %1130 = vst [vmem:[%s241 + $0x8] sm:$0xf] %v1066
        %1131 = vst [vmem:[%s241 + $0xc] sm:$0xf] %v1067
        %1132 = vst [vmem:[%s241 + $0x10] sm:$0xf] %v1068
        %1133 = vst [vmem:[%s241 + $0x14] sm:$0xf] %v1069
        %1134 = vst [vmem:[%s241 + $0x18] sm:$0xf] %v1070
        %1135 = vst [vmem:[%s241 + $0x1c] sm:$0xf] %v1071
        %1136 = vst [vmem:[%s241 + $0x20] sm:$0xf] %v1072
        %1137 = vst [vmem:[%s241 + $0x24] sm:$0xf] %v1073
        %1138 = vst [vmem:[%s241 + $0x28] sm:$0xf] %v1074
        %1139 = vst [vmem:[%s241 + $0x2c] sm:$0xf] %v1075
        %1140 = vst [vmem:[%s241 + $0x30] sm:$0xf] %v1076
        %1141 = vst [vmem:[%s241 + $0x34] sm:$0xf] %v1077
        %1142 = vst [vmem:[%s241 + $0x38] sm:$0xf] %v1078
        %1143 = vst [vmem:[%s241 + $0x3c] sm:$0xf] %v1079
        %1144 = vst [vmem:[%s241 + $0x40] sm:$0xf] %v1080
        %1145 = vst [vmem:[%s241 + $0x44] sm:$0xf] %v1081
        %1146 = vst [vmem:[%s241 + $0x48] sm:$0xf] %v1082
        %1147 = vst [vmem:[%s241 + $0x4c] sm:$0xf] %v1083
        %1148 = vst [vmem:[%s241 + $0x50] sm:$0xf] %v1084
        %1149 = vst [vmem:[%s241 + $0x54] sm:$0xf] %v1085
        %1150 = vst [vmem:[%s241 + $0x58] sm:$0xf] %v1086
        %1151 = vst [vmem:[%s241 + $0x5c] sm:$0xf] %v1087
        %1152 = vst [vmem:[%s241 + $0x60] sm:$0xf] %v1088
        %1153 = vst [vmem:[%s241 + $0x64] sm:$0xf] %v1089
        %1154 = vst [vmem:[%s241 + $0x68] sm:$0xf] %v1090
        %1155 = vst [vmem:[%s241 + $0x6c] sm:$0xf] %v1091
        %1156 = vst [vmem:[%s241 + $0x70] sm:$0xf] %v1092
        %1157 = vst [vmem:[%s241 + $0x74] sm:$0xf] %v1093
        %1158 = vst [vmem:[%s241 + $0x78] sm:$0xf] %v1094
        %1159 = vst [vmem:[%s241 + $0x7c] sm:$0xf] %v1095
      $region40: #{rep_n_bottleneck_forward.2} parent=31 // pred_fallthru
        _
      %s1160 = smul.u32 32, %s19
      %p1161 = scmp.lt.s32.totalorder %s1160, 63
      %s1162 = scalar_select %p1161, %s1160, 63
      %p1163 = scmp.lt.s32.totalorder %s20, 0
      %s1164 = scalar_select %p1163, %s20, 0
      %s1165 = sadd.s32 %s1164, %s1162
      %s1166 = smul.addr %s1165, 4
      %s1167 = scalar_lea.vmem %s3, %s1166
      // Predicated region
      $region41: #{rep_n_bottleneck_forward.2} parent=31 // pred_check
        %p1168 = pneg %p133
      $region42: #{rep_n_bottleneck_forward.2} parent=31 // pred_check_branch
        %1170 = sbr.rel (%p1168) target = $region44
      $region43: #{rep_n_bottleneck_forward.2} parent=31 // pred_region
        %s1171 = smul.u32 32, %s19
      $region44: #{rep_n_bottleneck_forward.2} parent=31 // pred_fallthru
        _
    $region32: #{rep_n_bottleneck_forward.2} parent=5 // pred_fallthru
      _
    %p1172 = scmp.le.s32.totalorder 2, %s9
    // Predicated region
    $region45: #{rep_n_bottleneck_forward.2} parent=5 // pred_check
      %p1173 = pneg %p1172
    $region46: #{rep_n_bottleneck_forward.2} parent=5 // pred_check_branch
      %1175 = sbr.rel (%p1173) target = $region48
    $region47: #{rep_n_bottleneck_forward.2} parent=5 // pred_region
      %s1176 = ssub.s32 %s9, 2
      // Predicated region
      $region49: #{rep_n_bottleneck_forward.2} parent=47 // pred_check
        %p1177 = pneg %p139
      $region50: #{rep_n_bottleneck_forward.2} parent=47 // pred_check_branch
        %1179 = sbr.rel (%p1177) target = $region52
      $region51: #{rep_n_bottleneck_forward.2} parent=47 // pred_region
        %s1180 = smul.u32 32, %s22
        %p1181 = scmp.lt.s32.totalorder %s1180, 63
        %s1182 = scalar_select %p1181, %s1180, 63
        %p1183 = scmp.lt.s32.totalorder %s23, 0
        %s1184 = scalar_select %p1183, %s23, 0
        %s1185 = sadd.s32 %s1184, %s1182
        %s1186 = smul.addr %s1185, 4
        %s1187 = scalar_lea.vmem %s3, %s1186
      $region52: #{rep_n_bottleneck_forward.2} parent=47 // pred_fallthru
        _
    $region48: #{rep_n_bottleneck_forward.2} parent=5 // pred_fallthru
      _
  $region6: #{rep_n_bottleneck_forward.2} parent=0 // loop_footer
    %s13 = sadd.s32 1, %s9
  $region7: #{rep_n_bottleneck_forward.2} parent=0 // loop_footer_branch
    %8 = sbr.rel target = $region3
  $region8: #{rep_n_bottleneck_forward.2} parent=0 // loop_exit
    _

// kernel: rep_n_bottleneck_forward.3
$region0: #{rep_n_bottleneck_forward.3}
  #allocation0 [shape = 'u32[]', space=smem, size = 0x4, offset = 0x4, fixed_abs, tag = 'smem constant byte address 0x4 - core index']
  #allocation1 [shape = 'u32[144,128]{1,0:T(1,128)}', space=vmem, size = 0x12000, scoped, tag = 'internal scratch']
  #allocation2 [shape = 'f32[256,128]{1,0:T(8,128)}', space=vmem, size = 0x20000, scoped, tag = 'scratch operand']
  %s0 = inlined_call_operand.vmem [shape: bf16[512,128], index: 0, kind: input, shape index: {}]
  %s1 = inlined_call_operand.vmem [shape: bf16[128,128], index: 1, kind: input, shape index: {}]
  %s2 = inlined_call_operand.vmem [shape: f32[1,128], index: 2, kind: input, shape index: {}]
  %s3 = inlined_call_operand.vmem [shape: bf16[512,128], index: 3, kind: input, shape index: {}]
  %s4 = inlined_call_operand.vmem [shape: bf16[512,128], index: 4, kind: output, shape index: {}]
  %s5 = sld [smem:[#allocation0]]
  $region57: #{rep_n_bottleneck_forward.3} parent=0
    _
  %s7 = ssub.s32 1, %s5
  %s8 = scalar_select 0, %s7, %s5
  loop: start=0, step=1, limit=4
  $region2: #{rep_n_bottleneck_forward.3} parent=0 // loop_pre_header
    _
  $region3: #{rep_n_bottleneck_forward.3} parent=0 // loop_header
    %s10 = sphi 0, %s14
    %p11 = scmp.ge.s32.totalorder %s10, 4
    %s17 = sphi 0, %s36
    %s18 = sphi 0, %s32
    %s19 = sphi 0, %s28
    %s20 = sphi 0, %s17
    %s21 = sphi 0, %s18
    %s22 = sphi 0, %s19
    %s23 = sphi 0, %s20
    %s24 = sphi 0, %s21
    %s25 = sphi 0, %s22
    %s41 = sphi 0, %s43
    %s44 = sphi 0, %s41
    %s45 = sphi 0, %s44
    %s61 = sphi 0, %s45
    %s67 = sphi 0, %s69
    %s70 = sphi 0, %s67
    %s71 = sphi 0, %s70
    %s87 = sphi 0, %s71
    %s93 = sphi 0, %s95
    %s96 = sphi 0, %s93
    %s97 = sphi 0, %s96
    %s113 = sphi 0, %s97
    %s121 = sphi 0, %s123
    %s124 = sphi 0, %s121
    %s125 = sphi 0, %s124
    %s141 = sphi 0, %s125
    %s149 = sphi 0, %s151
    %s152 = sphi 0, %s149
    %s153 = sphi 0, %s152
    %s169 = sphi 0, %s153
  $region4: #{rep_n_bottleneck_forward.3} parent=0 // loop_header_branch
    %13 = sbr.rel (%p11) target = $region8
  $region5: #{rep_n_bottleneck_forward.3} parent=0 // loop_body
    %s15 = ssub.s32 %s10, 1
    %s16 = ssub.s32 %s10, 2
    %s26 = sadd.s32 1, %s19
    %p27 = scmp.ge.s32.totalorder %s26, 1
    %s28 = scalar_select %p27, 0, %s26
    %s29 = sadd.s32 1, %s18
    %s30 = scalar_select %p27, %s29, %s18
    %p31 = scmp.ge.s32.totalorder %s30, 1
    %s32 = scalar_select %p31, 0, %s30
    %s33 = sadd.s32 1, %s17
    %s34 = scalar_select %p31, %s33, %s17
    %p35 = scmp.ge.s32.totalorder %s34, 2
    %s36 = scalar_select %p35, 0, %s34
    %s37 = ssub.s32 %s17, %s36
    %s38 = ssub.s32 %s19, %s28
    %s39 = sor.u32 %s37, %s38
    %p40 = scmp.eq.s32.totalorder %s39, 0
    %s42 = sadd.s32 %s41, 1
    %s43 = scalar_select %p40, %s41, %s42
    %p46 = pneg %p40
    %p47 = scmp.eq.s32.totalorder %s10, 1
    %p48 = por %p46, %p47
    %p49 = scmp.ne.s32.totalorder %s41, %s44
    %p50 = scmp.eq.s32.totalorder %s10, 0
    %p51 = por %p49, %p50
    %p52 = scmp.ne.s32.totalorder %s41, %s44
    %p53 = scmp.eq.s32.totalorder %s15, 1
    %p54 = por %p52, %p53
    %p55 = scmp.ne.s32.totalorder %s44, %s45
    %p56 = scmp.eq.s32.totalorder %s15, 0
    %p57 = por %p55, %p56
    %p58 = scmp.ne.s32.totalorder %s44, %s45
    %p59 = scmp.eq.s32.totalorder %s16, 1
    %p60 = por %p58, %p59
    %p62 = scmp.ne.s32.totalorder %s45, %s61
    %p63 = scmp.eq.s32.totalorder %s16, 0
    %p64 = por %p62, %p63
    %s65 = ssub.s32 %s18, %s32
    %p66 = scmp.eq.s32.totalorder %s65, 0
    %s68 = sadd.s32 %s67, 1
    %s69 = scalar_select %p66, %s67, %s68
    %p72 = pneg %p66
    %p73 = scmp.eq.s32.totalorder %s10, 1
    %p74 = por %p72, %p73
    %p75 = scmp.ne.s32.totalorder %s67, %s70
    %p76 = scmp.eq.s32.totalorder %s10, 0
    %p77 = por %p75, %p76
    %p78 = scmp.ne.s32.totalorder %s67, %s70
    %p79 = scmp.eq.s32.totalorder %s15, 1
    %p80 = por %p78, %p79
    %p81 = scmp.ne.s32.totalorder %s70, %s71
    %p82 = scmp.eq.s32.totalorder %s15, 0
    %p83 = por %p81, %p82
    %p84 = scmp.ne.s32.totalorder %s70, %s71
    %p85 = scmp.eq.s32.totalorder %s16, 1
    %p86 = por %p84, %p85
    %p88 = scmp.ne.s32.totalorder %s71, %s87
    %p89 = scmp.eq.s32.totalorder %s16, 0
    %p90 = por %p88, %p89
    %s91 = ssub.s32 %s18, %s32
    %p92 = scmp.eq.s32.totalorder %s91, 0
    %s94 = sadd.s32 %s93, 1
    %s95 = scalar_select %p92, %s93, %s94
    %p98 = pneg %p92
    %p99 = scmp.eq.s32.totalorder %s10, 1
    %p100 = por %p98, %p99
    %p101 = scmp.ne.s32.totalorder %s93, %s96
    %p102 = scmp.eq.s32.totalorder %s10, 0
    %p103 = por %p101, %p102
    %p104 = scmp.ne.s32.totalorder %s93, %s96
    %p105 = scmp.eq.s32.totalorder %s15, 1
    %p106 = por %p104, %p105
    %p107 = scmp.ne.s32.totalorder %s96, %s97
    %p108 = scmp.eq.s32.totalorder %s15, 0
    %p109 = por %p107, %p108
    %p110 = scmp.ne.s32.totalorder %s96, %s97
    %p111 = scmp.eq.s32.totalorder %s16, 1
    %p112 = por %p110, %p111
    %p114 = scmp.ne.s32.totalorder %s97, %s113
    %p115 = scmp.eq.s32.totalorder %s16, 0
    %p116 = por %p114, %p115
    %s117 = ssub.s32 %s17, %s36
    %s118 = ssub.s32 %s18, %s32
    %s119 = sor.u32 %s117, %s118
    %p120 = scmp.eq.s32.totalorder %s119, 0
    %s122 = sadd.s32 %s121, 1
    %s123 = scalar_select %p120, %s121, %s122
    %p126 = pneg %p120
    %p127 = scmp.eq.s32.totalorder %s10, 1
    %p128 = por %p126, %p127
    %p129 = scmp.ne.s32.totalorder %s121, %s124
    %p130 = scmp.eq.s32.totalorder %s10, 0
    %p131 = por %p129, %p130
    %p132 = scmp.ne.s32.totalorder %s121, %s124
    %p133 = scmp.eq.s32.totalorder %s15, 1
    %p134 = por %p132, %p133
    %p135 = scmp.ne.s32.totalorder %s124, %s125
    %p136 = scmp.eq.s32.totalorder %s15, 0
    %p137 = por %p135, %p136
    %p138 = scmp.ne.s32.totalorder %s124, %s125
    %p139 = scmp.eq.s32.totalorder %s16, 1
    %p140 = por %p138, %p139
    %p142 = scmp.ne.s32.totalorder %s125, %s141
    %p143 = scmp.eq.s32.totalorder %s16, 0
    %p144 = por %p142, %p143
    %s145 = ssub.s32 %s17, %s36
    %s146 = ssub.s32 %s18, %s32
    %s147 = sor.u32 %s145, %s146
    %p148 = scmp.eq.s32.totalorder %s147, 0
    %s150 = sadd.s32 %s149, 1
    %s151 = scalar_select %p148, %s149, %s150
    %p154 = pneg %p148
    %p155 = scmp.eq.s32.totalorder %s10, 1
    %p156 = por %p154, %p155
    %p157 = scmp.ne.s32.totalorder %s149, %s152
    %p158 = scmp.eq.s32.totalorder %s10, 0
    %p159 = por %p157, %p158
    %p160 = scmp.ne.s32.totalorder %s149, %s152
    %p161 = scmp.eq.s32.totalorder %s15, 1
    %p162 = por %p160, %p161
    %p163 = scmp.ne.s32.totalorder %s152, %s153
    %p164 = scmp.eq.s32.totalorder %s15, 0
    %p165 = por %p163, %p164
    %p166 = scmp.ne.s32.totalorder %s152, %s153
    %p167 = scmp.eq.s32.totalorder %s16, 1
    %p168 = por %p166, %p167
    %p170 = scmp.ne.s32.totalorder %s153, %s169
    %p171 = scmp.eq.s32.totalorder %s16, 0
    %p172 = por %p170, %p171
    %p173 = scmp.le.s32.totalorder 1, %s10
    %p174 = scmp.lt.s32.totalorder %s10, 3
    %p175 = pnand %p173, %p174
    %p176 = pneg %p175
    // Predicated region
    $region9: #{rep_n_bottleneck_forward.3} parent=5 // pred_check
      _
    $region10: #{rep_n_bottleneck_forward.3} parent=5 // pred_check_branch
      %178 = sbr.rel (%p175) target = $region12
    $region11: #{rep_n_bottleneck_forward.3} parent=5 // pred_region
      %s179 = ssub.s32 %s10, 1
      // Predicated region
      $region13: #{rep_n_bottleneck_forward.3} parent=11 // pred_check
        %p180 = pneg %p83
      $region14: #{rep_n_bottleneck_forward.3} parent=11 // pred_check_branch
        %182 = sbr.rel (%p180) target = $region16
      $region15: #{rep_n_bottleneck_forward.3} parent=11 // pred_region
        %p183 = scmp.lt.s32.totalorder %s21, 0
        %s184 = scalar_select %p183, %s21, 0
        %s185 = smul.addr %s184, 4
        %s186 = scalar_lea.vmem %s1, %s185
      $region16: #{rep_n_bottleneck_forward.3} parent=11 // pred_fallthru
        _
      // Predicated region
      $region17: #{rep_n_bottleneck_forward.3} parent=11 // pred_check
        %p187 = pneg %p109
      $region18: #{rep_n_bottleneck_forward.3} parent=11 // pred_check_branch
        %189 = sbr.rel (%p187) target = $region20
      $region19: #{rep_n_bottleneck_forward.3} parent=11 // pred_region
        %p190 = scmp.lt.s32.totalorder %s21, 0
        %s191 = scalar_select %p190, %s21, 0
        %s192 = scalar_lea.vmem %s2, %s191
      $region20: #{rep_n_bottleneck_forward.3} parent=11 // pred_fallthru
        _
    $region12: #{rep_n_bottleneck_forward.3} parent=5 // pred_fallthru
      _
    %p193 = scmp.lt.s32.totalorder %s10, 2
    // Predicated region
    $region21: #{rep_n_bottleneck_forward.3} parent=5 // pred_check
      %p194 = pneg %p193
    $region22: #{rep_n_bottleneck_forward.3} parent=5 // pred_check_branch
      %196 = sbr.rel (%p194) target = $region24
    $region23: #{rep_n_bottleneck_forward.3} parent=5 // pred_region
      // Predicated region
      $region25: #{rep_n_bottleneck_forward.3} parent=23 // pred_check
        %p197 = pneg %p51
      $region26: #{rep_n_bottleneck_forward.3} parent=23 // pred_check_branch
        %199 = sbr.rel (%p197) target = $region28
      $region27: #{rep_n_bottleneck_forward.3} parent=23 // pred_region
        %s200 = smul.u32 32, %s17
        %p201 = scmp.lt.s32.totalorder %s200, 63
        %s202 = scalar_select %p201, %s200, 63
        %p203 = scmp.lt.s32.totalorder %s19, 0
        %s204 = scalar_select %p203, %s19, 0
        %s205 = sadd.s32 %s204, %s202
        %s206 = smul.addr %s205, 4
        %s207 = scalar_lea.vmem %s0, %s206
        %s208 = smul.u32 32, %s17
      $region28: #{rep_n_bottleneck_forward.3} parent=23 // pred_fallthru
        _
      // Predicated region
      $region29: #{rep_n_bottleneck_forward.3} parent=23 // pred_check
        %p209 = pneg %p131
      $region30: #{rep_n_bottleneck_forward.3} parent=23 // pred_check_branch
        %211 = sbr.rel (%p209) target = $region32
      $region31: #{rep_n_bottleneck_forward.3} parent=23 // pred_region
        %s212 = smul.u32 32, %s17
        %p213 = scmp.lt.s32.totalorder %s212, 63
        %s214 = scalar_select %p213, %s212, 63
        %p215 = scmp.lt.s32.totalorder %s18, 0
        %s216 = scalar_select %p215, %s18, 0
        %s217 = sadd.s32 %s216, %s214
        %s218 = smul.addr %s217, 4
        %s219 = scalar_lea.vmem %s3, %s218
        %s220 = smul.u32 32, %s17
      $region32: #{rep_n_bottleneck_forward.3} parent=23 // pred_fallthru
        _
    $region24: #{rep_n_bottleneck_forward.3} parent=5 // pred_fallthru
      _
    %p221 = scmp.le.s32.totalorder 1, %s10
    %p222 = scmp.lt.s32.totalorder %s10, 3
    %p223 = pnand %p221, %p222
    %p224 = pneg %p223
    // Predicated region
    $region33: #{rep_n_bottleneck_forward.3} parent=5 // pred_check
      _
    $region34: #{rep_n_bottleneck_forward.3} parent=5 // pred_check_branch
      %226 = sbr.rel (%p223) target = $region36
    $region35: #{rep_n_bottleneck_forward.3} parent=5 // pred_region
      %s227 = ssub.s32 %s10, 1
      %s228 = smul.u32 32, %s20
      %p229 = scmp.lt.s32.totalorder %s228, 63
      %s230 = scalar_select %p229, %s228, 63
      %p231 = scmp.lt.s32.totalorder %s22, 0
      %s232 = scalar_select %p231, %s22, 0
      %s233 = sadd.s32 %s232, %s230
      %s234 = smul.addr %s233, 4
      %s235 = scalar_lea.vmem %s0, %s234
      %p236 = pneg %p57
      %p237 = pneg %p54
      %p238 = scmp.lt.s32.totalorder %s21, 0
      %s239 = scalar_select %p238, %s21, 0
      %s240 = smul.addr %s239, 4
      %s241 = scalar_lea.vmem %s1, %s240
      %p242 = pneg %p83
      %p243 = pneg %p80
      %p244 = scmp.lt.s32.totalorder %s21, 0
      %s245 = scalar_select %p244, %s21, 0
      %s246 = scalar_lea.vmem %s2, %s245
      %p247 = pneg %p109
      %p248 = pneg %p106
      %s249 = smul.u32 32, %s20
      %p250 = scmp.lt.s32.totalorder %s249, 63
      %s251 = scalar_select %p250, %s249, 63
      %p252 = scmp.lt.s32.totalorder %s21, 0
      %s253 = scalar_select %p252, %s21, 0
      %s254 = sadd.s32 %s253, %s251
      %s255 = smul.addr %s254, 4
      %s256 = scalar_lea.vmem %s3, %s255
      %p257 = pneg %p137
      %p258 = pneg %p134
      %p259 = pneg %p165
      %p260 = pneg %p162
      %s261 = smul.u32 32, %s20
      %p262 = scmp.lt.s32.totalorder %s261, 63
      %s263 = scalar_select %p262, %s261, 63
      %p264 = scmp.lt.s32.totalorder %s21, 0
      %s265 = scalar_select %p264, %s21, 0
      %s266 = sadd.s32 %s265, %s263
      %s267 = smul.addr %s266, 4
      %s268 = scalar_lea.vmem %s4, %s267
      %s269 = smul.u32 32, %s20
      %p270 = scmp.lt.s32.totalorder %s269, 63
      %s271 = scalar_select %p270, %s269, 63
      %p272 = scmp.lt.s32.totalorder %s22, 0
      %s273 = scalar_select %p272, %s22, 0
      %s274 = sadd.s32 %s273, %s271
      %s275 = smul.addr %s274, 4
      %s276 = scalar_lea.vmem %s0, %s275
      %s277 = smul.u32 32, %s20
      %p278 = scmp.lt.s32.totalorder %s21, 0
      %s279 = scalar_select %p278, %s21, 0
      %s280 = smul.addr %s279, 4
      %s281 = scalar_lea.vmem %s1, %s280
      %p282 = scmp.lt.s32.totalorder %s21, 0
      %s283 = scalar_select %p282, %s21, 0
      %s284 = scalar_lea.vmem %s2, %s283
      %s285 = smul.u32 32, %s20
      %p286 = scmp.lt.s32.totalorder %s285, 63
      %s287 = scalar_select %p286, %s285, 63
      %p288 = scmp.lt.s32.totalorder %s21, 0
      %s289 = scalar_select %p288, %s21, 0
      %s290 = sadd.s32 %s289, %s287
      %s291 = smul.addr %s290, 4
      %s292 = scalar_lea.vmem %s3, %s291
      %s293 = smul.u32 32, %s20
      %s294 = smul.u32 32, %s20
      %p295 = scmp.lt.s32.totalorder %s294, 63
      %s296 = scalar_select %p295, %s294, 63
      %p297 = scmp.lt.s32.totalorder %s21, 0
      %s298 = scalar_select %p297, %s21, 0
      %s299 = sadd.s32 %s298, %s296
      %s300 = smul.addr %s299, 4
      %s301 = scalar_lea.vmem %s4, %s300
      %s302 = smul.u32 32, %s20
      %p304 = scmp.eq.s32.totalorder %s22, 0
      // Predicated region
      $region37: #{rep_n_bottleneck_forward.3} parent=35 // pred_check
        %p305 = pneg %p304
      $region38: #{rep_n_bottleneck_forward.3} parent=35 // pred_check_branch
        %307 = sbr.rel (%p305) target = $region40
      $region39: #{rep_n_bottleneck_forward.3} parent=35 // pred_region
        %308 = vst [vmem:[#allocation2] sm:$0xff] 0.0
        %309 = vst [vmem:[#allocation2 + $0x8] sm:$0xff] 0.0
        %310 = vst [vmem:[#allocation2 + $0x10] sm:$0xff] 0.0
        %311 = vst [vmem:[#allocation2 + $0x18] sm:$0xff] 0.0
        %312 = vst [vmem:[#allocation2 + $0x20] sm:$0xff] 0.0
        %313 = vst [vmem:[#allocation2 + $0x28] sm:$0xff] 0.0
        %314 = vst [vmem:[#allocation2 + $0x30] sm:$0xff] 0.0
        %315 = vst [vmem:[#allocation2 + $0x38] sm:$0xff] 0.0
        %316 = vst [vmem:[#allocation2 + $0x40] sm:$0xff] 0.0
        %317 = vst [vmem:[#allocation2 + $0x48] sm:$0xff] 0.0
        %318 = vst [vmem:[#allocation2 + $0x50] sm:$0xff] 0.0
        %319 = vst [vmem:[#allocation2 + $0x58] sm:$0xff] 0.0
        %320 = vst [vmem:[#allocation2 + $0x60] sm:$0xff] 0.0
        %321 = vst [vmem:[#allocation2 + $0x68] sm:$0xff] 0.0
        %322 = vst [vmem:[#allocation2 + $0x70] sm:$0xff] 0.0
        %323 = vst [vmem:[#allocation2 + $0x78] sm:$0xff] 0.0
        %324 = vst [vmem:[#allocation2 + $0x80] sm:$0xff] 0.0
        %325 = vst [vmem:[#allocation2 + $0x88] sm:$0xff] 0.0
        %326 = vst [vmem:[#allocation2 + $0x90] sm:$0xff] 0.0
        %327 = vst [vmem:[#allocation2 + $0x98] sm:$0xff] 0.0
        %328 = vst [vmem:[#allocation2 + $0xa0] sm:$0xff] 0.0
        %329 = vst [vmem:[#allocation2 + $0xa8] sm:$0xff] 0.0
        %330 = vst [vmem:[#allocation2 + $0xb0] sm:$0xff] 0.0
        %331 = vst [vmem:[#allocation2 + $0xb8] sm:$0xff] 0.0
        %332 = vst [vmem:[#allocation2 + $0xc0] sm:$0xff] 0.0
        %333 = vst [vmem:[#allocation2 + $0xc8] sm:$0xff] 0.0
        %334 = vst [vmem:[#allocation2 + $0xd0] sm:$0xff] 0.0
        %335 = vst [vmem:[#allocation2 + $0xd8] sm:$0xff] 0.0
        %336 = vst [vmem:[#allocation2 + $0xe0] sm:$0xff] 0.0
        %337 = vst [vmem:[#allocation2 + $0xe8] sm:$0xff] 0.0
        %338 = vst [vmem:[#allocation2 + $0xf0] sm:$0xff] 0.0
        %339 = vst [vmem:[#allocation2 + $0xf8] sm:$0xff] 0.0
      $region40: #{rep_n_bottleneck_forward.3} parent=35 // pred_fallthru
        _
      %s340 = smul.u32 %s22, 128
      %v341 = vld [vmem:[#allocation2] sm:$0xff]
      %v342 = vld [vmem:[#allocation2 + $0x8] sm:$0xff]
      %v343 = vld [vmem:[#allocation2 + $0x10] sm:$0xff]
      %v344 = vld [vmem:[#allocation2 + $0x18] sm:$0xff]
      %v345 = vld [vmem:[#allocation2 + $0x20] sm:$0xff]
      %v346 = vld [vmem:[#allocation2 + $0x28] sm:$0xff]
      %v347 = vld [vmem:[#allocation2 + $0x30] sm:$0xff]
      %v348 = vld [vmem:[#allocation2 + $0x38] sm:$0xff]
      %v349 = vld [vmem:[#allocation2 + $0x40] sm:$0xff]
      %v350 = vld [vmem:[#allocation2 + $0x48] sm:$0xff]
      %v351 = vld [vmem:[#allocation2 + $0x50] sm:$0xff]
      %v352 = vld [vmem:[#allocation2 + $0x58] sm:$0xff]
      %v353 = vld [vmem:[#allocation2 + $0x60] sm:$0xff]
      %v354 = vld [vmem:[#allocation2 + $0x68] sm:$0xff]
      %v355 = vld [vmem:[#allocation2 + $0x70] sm:$0xff]
      %v356 = vld [vmem:[#allocation2 + $0x78] sm:$0xff]
      %v357 = vld [vmem:[#allocation2 + $0x80] sm:$0xff]
      %v358 = vld [vmem:[#allocation2 + $0x88] sm:$0xff]
      %v359 = vld [vmem:[#allocation2 + $0x90] sm:$0xff]
      %v360 = vld [vmem:[#allocation2 + $0x98] sm:$0xff]
      %v361 = vld [vmem:[#allocation2 + $0xa0] sm:$0xff]
      %v362 = vld [vmem:[#allocation2 + $0xa8] sm:$0xff]
      %v363 = vld [vmem:[#allocation2 + $0xb0] sm:$0xff]
      %v364 = vld [vmem:[#allocation2 + $0xb8] sm:$0xff]
      %v365 = vld [vmem:[#allocation2 + $0xc0] sm:$0xff]
      %v366 = vld [vmem:[#allocation2 + $0xc8] sm:$0xff]
      %v367 = vld [vmem:[#allocation2 + $0xd0] sm:$0xff]
      %v368 = vld [vmem:[#allocation2 + $0xd8] sm:$0xff]
      %v369 = vld [vmem:[#allocation2 + $0xe0] sm:$0xff]
      %v370 = vld [vmem:[#allocation2 + $0xe8] sm:$0xff]
      %v371 = vld [vmem:[#allocation2 + $0xf0] sm:$0xff]
      %v372 = vld [vmem:[#allocation2 + $0xf8] sm:$0xff]
      %v373 = vld [vmem:[%s276] sm:$0xf]
      %v374 = vld [vmem:[%s276 + $0x4] sm:$0xf]
      %v375 = vld [vmem:[%s276 + $0x8] sm:$0xf]
      %v376 = vld [vmem:[%s276 + $0xc] sm:$0xf]
      %v377 = vld [vmem:[%s276 + $0x10] sm:$0xf]
      %v378 = vld [vmem:[%s276 + $0x14] sm:$0xf]
      %v379 = vld [vmem:[%s276 + $0x18] sm:$0xf]
      %v380 = vld [vmem:[%s276 + $0x1c] sm:$0xf]
      %v381 = vld [vmem:[%s276 + $0x20] sm:$0xf]
      %v382 = vld [vmem:[%s276 + $0x24] sm:$0xf]
      %v383 = vld [vmem:[%s276 + $0x28] sm:$0xf]
      %v384 = vld [vmem:[%s276 + $0x2c] sm:$0xf]
      %v385 = vld [vmem:[%s276 + $0x30] sm:$0xf]
      %v386 = vld [vmem:[%s276 + $0x34] sm:$0xf]
      %v387 = vld [vmem:[%s276 + $0x38] sm:$0xf]
      %v388 = vld [vmem:[%s276 + $0x3c] sm:$0xf]
      %v389 = vld [vmem:[%s276 + $0x40] sm:$0xf]
      %v390 = vld [vmem:[%s276 + $0x44] sm:$0xf]
      %v391 = vld [vmem:[%s276 + $0x48] sm:$0xf]
      %v392 = vld [vmem:[%s276 + $0x4c] sm:$0xf]
      %v393 = vld [vmem:[%s276 + $0x50] sm:$0xf]
      %v394 = vld [vmem:[%s276 + $0x54] sm:$0xf]
      %v395 = vld [vmem:[%s276 + $0x58] sm:$0xf]
      %v396 = vld [vmem:[%s276 + $0x5c] sm:$0xf]
      %v397 = vld [vmem:[%s276 + $0x60] sm:$0xf]
      %v398 = vld [vmem:[%s276 + $0x64] sm:$0xf]
      %v399 = vld [vmem:[%s276 + $0x68] sm:$0xf]
      %v400 = vld [vmem:[%s276 + $0x6c] sm:$0xf]
      %v401 = vld [vmem:[%s276 + $0x70] sm:$0xf]
      %v402 = vld [vmem:[%s276 + $0x74] sm:$0xf]
      %v403 = vld [vmem:[%s276 + $0x78] sm:$0xf]
      %v404 = vld [vmem:[%s276 + $0x7c] sm:$0xf]
      %s405 = sshra.s32 %s340, 3
      %s406 = sand.u32 %s340, 7
      %s407 = smul.addr %s405, 4
      %s408 = scalar_lea.vmem %s281, %s407
      %v409 = vld [vmem:[%s408] sm:$0xf]
      %v410 = vld [vmem:[%s408 + $0x4] sm:$0xf]
      %v411 = vld [vmem:[%s408 + $0x8] sm:$0xf]
      %v412 = vld [vmem:[%s408 + $0xc] sm:$0xf]
      %v413 = vld [vmem:[%s408 + $0x10] sm:$0xf]
      %v414 = vld [vmem:[%s408 + $0x14] sm:$0xf]
      %v415 = vld [vmem:[%s408 + $0x18] sm:$0xf]
      %v416 = vld [vmem:[%s408 + $0x1c] sm:$0xf]
      %v417 = vld [vmem:[%s408 + $0x20] sm:$0xf]
      %v418 = vld [vmem:[%s408 + $0x24] sm:$0xf]
      %v419 = vld [vmem:[%s408 + $0x28] sm:$0xf]
      %v420 = vld [vmem:[%s408 + $0x2c] sm:$0xf]
      %v421 = vld [vmem:[%s408 + $0x30] sm:$0xf]
      %v422 = vld [vmem:[%s408 + $0x34] sm:$0xf]
      %v423 = vld [vmem:[%s408 + $0x38] sm:$0xf]
      %v424 = vld [vmem:[%s408 + $0x3c] sm:$0xf]
      %v457 = vunpack.c.l.b16 %v373
      %v458 = vunpack.c.l.b16 %v374
      %v459 = vunpack.c.l.b16 %v375
      %v460 = vunpack.c.l.b16 %v376
      %v461 = vunpack.c.l.b16 %v377
      %v462 = vunpack.c.l.b16 %v378
      %v463 = vunpack.c.l.b16 %v379
      %v464 = vunpack.c.l.b16 %v380
      %v465 = vunpack.c.l.b16 %v381
      %v466 = vunpack.c.l.b16 %v382
      %v467 = vunpack.c.l.b16 %v383
      %v468 = vunpack.c.l.b16 %v384
      %v469 = vunpack.c.l.b16 %v385
      %v470 = vunpack.c.l.b16 %v386
      %v471 = vunpack.c.l.b16 %v387
      %v472 = vunpack.c.l.b16 %v388
      %v473 = vunpack.c.l.b16 %v389
      %v474 = vunpack.c.l.b16 %v390
      %v475 = vunpack.c.l.b16 %v391
      %v476 = vunpack.c.l.b16 %v392
      %v477 = vunpack.c.l.b16 %v393
      %v478 = vunpack.c.l.b16 %v394
      %v479 = vunpack.c.l.b16 %v395
      %v480 = vunpack.c.l.b16 %v396
      %v481 = vunpack.c.l.b16 %v397
      %v482 = vunpack.c.l.b16 %v398
      %v483 = vunpack.c.l.b16 %v399
      %v484 = vunpack.c.l.b16 %v400
      %v485 = vunpack.c.l.b16 %v401
      %v486 = vunpack.c.l.b16 %v402
      %v487 = vunpack.c.l.b16 %v403
      %v488 = vunpack.c.l.b16 %v404
      %v489 = vpack.c.b16 %v458, %v457
      %v490 = vpack.c.b16 %v460, %v459
      %v491 = vpack.c.b16 %v462, %v461
      %v492 = vpack.c.b16 %v464, %v463
      %v493 = vpack.c.b16 %v466, %v465
      %v494 = vpack.c.b16 %v468, %v467
      %v495 = vpack.c.b16 %v470, %v469
      %v496 = vpack.c.b16 %v472, %v471
      %v497 = vpack.c.b16 %v474, %v473
      %v498 = vpack.c.b16 %v476, %v475
      %v499 = vpack.c.b16 %v478, %v477
      %v500 = vpack.c.b16 %v480, %v479
      %v501 = vpack.c.b16 %v482, %v481
      %v502 = vpack.c.b16 %v484, %v483
      %v503 = vpack.c.b16 %v486, %v485
      %v504 = vpack.c.b16 %v488, %v487
      %v537 = vunpack.c.l.b16 %v409
      %v538 = vunpack.c.l.b16 %v410
      %v539 = vunpack.c.l.b16 %v411
      %v540 = vunpack.c.l.b16 %v412
      %v541 = vunpack.c.l.b16 %v413
      %v542 = vunpack.c.l.b16 %v414
      %v543 = vunpack.c.l.b16 %v415
      %v544 = vunpack.c.l.b16 %v416
      %v545 = vunpack.c.l.b16 %v417
      %v546 = vunpack.c.l.b16 %v418
      %v547 = vunpack.c.l.b16 %v419
      %v548 = vunpack.c.l.b16 %v420
      %v549 = vunpack.c.l.b16 %v421
      %v550 = vunpack.c.l.b16 %v422
      %v551 = vunpack.c.l.b16 %v423
      %v552 = vunpack.c.l.b16 %v424
      %v553 = vpack.c.b16 %v538, %v537
      %v554 = vpack.c.b16 %v540, %v539
      %v555 = vpack.c.b16 %v542, %v541
      %v556 = vpack.c.b16 %v544, %v543
      %v557 = vpack.c.b16 %v546, %v545
      %v558 = vpack.c.b16 %v548, %v547
      %v559 = vpack.c.b16 %v550, %v549
      %v560 = vpack.c.b16 %v552, %v551
      %569 = vmatprep.subr.bf16.mxu0 0
      %570 = vmatpush1.bf16.msra.mxu0 %v553
      %571 = vmatprep.subr.bf16.mxu0 0
      %572 = vmatpush1.bf16.msra.mxu0 %v554
      %573 = vmatprep.subr.bf16.mxu0 0
      %574 = vmatpush1.bf16.msra.mxu0 %v555
      %575 = vmatprep.subr.bf16.mxu0 0
      %576 = vmatpush1.bf16.msra.mxu0 %v556
      %577 = vmatprep.subr.bf16.mxu0 0
      %578 = vmatpush1.bf16.msra.mxu0 %v557
      %579 = vmatprep.subr.bf16.mxu0 0
      %580 = vmatpush1.bf16.msra.mxu0 %v558
      %581 = vmatprep.subr.bf16.mxu0 0
      %582 = vmatpush1.bf16.msra.mxu0 %v559
      %583 = vmatprep.subr.bf16.mxu0 0
      %584 = vmatpush1.bf16.msra.mxu0 %v560
      %585 = vmatprep.subr.bf16.mxu0 0
      %586 = vmatpush1.bf16.msra.mxu0 0
      %587 = vmatprep.subr.bf16.mxu0 0
      %588 = vmatpush1.bf16.msra.mxu0 0
      %589 = vmatprep.subr.bf16.mxu0 0
      %590 = vmatpush1.bf16.msra.mxu0 0
      %591 = vmatprep.subr.bf16.mxu0 0
      %592 = vmatpush1.bf16.msra.mxu0 0
      %593 = vmatprep.subr.bf16.mxu0 0
      %594 = vmatpush1.bf16.msra.mxu0 0
      %595 = vmatprep.subr.bf16.mxu0 0
      %596 = vmatpush1.bf16.msra.mxu0 0
      %597 = vmatprep.subr.bf16.mxu0 0
      %598 = vmatpush1.bf16.msra.mxu0 0
      %599 = vmatprep.subr.bf16.mxu0 0
      %600 = vmatpush1.bf16.msra.mxu0 0
      %601 = vmatprep.mubr.bf16.mxu0 0
      %602 = vmatmul.mubr.bf16.gmra.mrb[0].mxu0 %v489
      %v603 = vpop.f32.mrb[0].mxu0
      %v604 = vadd.f32 0.0, %v603
      %v605 = vpop.f32.mrb[0].mxu0
      %v606 = vpop.f32.mrb[0].mxu0
      %v607 = vadd.f32 0.0, %v606
      %v608 = vpop.f32.mrb[0].mxu0
      %609 = vmatprep.mubr.bf16.mxu0 0
      %610 = vmatmul.mubr.bf16.gmra.mrb[0].mxu0 %v490
      %v611 = vpop.f32.mrb[0].mxu0
      %v612 = vadd.f32 0.0, %v611
      %v613 = vpop.f32.mrb[0].mxu0
      %v614 = vpop.f32.mrb[0].mxu0
      %v615 = vadd.f32 0.0, %v614
      %v616 = vpop.f32.mrb[0].mxu0
      %617 = vmatprep.mubr.bf16.mxu0 0
      %618 = vmatmul.mubr.bf16.gmra.mrb[0].mxu0 %v491
      %v619 = vpop.f32.mrb[0].mxu0
      %v620 = vadd.f32 0.0, %v619
      %v621 = vpop.f32.mrb[0].mxu0
      %v622 = vpop.f32.mrb[0].mxu0
      %v623 = vadd.f32 0.0, %v622
      %v624 = vpop.f32.mrb[0].mxu0
      %625 = vmatprep.mubr.bf16.mxu0 0
      %626 = vmatmul.mubr.bf16.gmra.mrb[0].mxu0 %v492
      %v627 = vpop.f32.mrb[0].mxu0
      %v628 = vadd.f32 0.0, %v627
      %v629 = vpop.f32.mrb[0].mxu0
      %v630 = vpop.f32.mrb[0].mxu0
      %v631 = vadd.f32 0.0, %v630
      %v632 = vpop.f32.mrb[0].mxu0
      %633 = vmatprep.mubr.bf16.mxu0 0
      %634 = vmatmul.mubr.bf16.gmra.mrb[0].mxu0 %v493
      %v635 = vpop.f32.mrb[0].mxu0
      %v636 = vadd.f32 0.0, %v635
      %v637 = vpop.f32.mrb[0].mxu0
      %v638 = vpop.f32.mrb[0].mxu0
      %v639 = vadd.f32 0.0, %v638
      %v640 = vpop.f32.mrb[0].mxu0
      %641 = vmatprep.mubr.bf16.mxu0 0
      %642 = vmatmul.mubr.bf16.gmra.mrb[0].mxu0 %v494
      %v643 = vpop.f32.mrb[0].mxu0
      %v644 = vadd.f32 0.0, %v643
      %v645 = vpop.f32.mrb[0].mxu0
      %v646 = vpop.f32.mrb[0].mxu0
      %v647 = vadd.f32 0.0, %v646
      %v648 = vpop.f32.mrb[0].mxu0
      %649 = vmatprep.mubr.bf16.mxu0 0
      %650 = vmatmul.mubr.bf16.gmra.mrb[0].mxu0 %v495
      %v651 = vpop.f32.mrb[0].mxu0
      %v652 = vadd.f32 0.0, %v651
      %v653 = vpop.f32.mrb[0].mxu0
      %v654 = vpop.f32.mrb[0].mxu0
      %v655 = vadd.f32 0.0, %v654
      %v656 = vpop.f32.mrb[0].mxu0
      %657 = vmatprep.mubr.bf16.mxu0 0
      %658 = vmatmul.mubr.bf16.gmra.mrb[0].mxu0 %v496
      %v659 = vpop.f32.mrb[0].mxu0
      %v660 = vadd.f32 0.0, %v659
      %v661 = vpop.f32.mrb[0].mxu0
      %v662 = vpop.f32.mrb[0].mxu0
      %v663 = vadd.f32 0.0, %v662
      %v664 = vpop.f32.mrb[0].mxu0
      %665 = vmatprep.mubr.bf16.mxu0 0
      %666 = vmatmul.mubr.bf16.gmra.mrb[0].mxu0 %v497
      %v667 = vpop.f32.mrb[0].mxu0
      %v668 = vadd.f32 0.0, %v667
      %v669 = vpop.f32.mrb[0].mxu0
      %v670 = vpop.f32.mrb[0].mxu0
      %v671 = vadd.f32 0.0, %v670
      %v672 = vpop.f32.mrb[0].mxu0
      %673 = vmatprep.mubr.bf16.mxu0 0
      %674 = vmatmul.mubr.bf16.gmra.mrb[0].mxu0 %v498
      %v675 = vpop.f32.mrb[0].mxu0
      %v676 = vadd.f32 0.0, %v675
      %v677 = vpop.f32.mrb[0].mxu0
      %v678 = vpop.f32.mrb[0].mxu0
      %v679 = vadd.f32 0.0, %v678
      %v680 = vpop.f32.mrb[0].mxu0
      %681 = vmatprep.mubr.bf16.mxu0 0
      %682 = vmatmul.mubr.bf16.gmra.mrb[0].mxu0 %v499
      %v683 = vpop.f32.mrb[0].mxu0
      %v684 = vadd.f32 0.0, %v683
      %v685 = vpop.f32.mrb[0].mxu0
      %v686 = vpop.f32.mrb[0].mxu0
      %v687 = vadd.f32 0.0, %v686
      %v688 = vpop.f32.mrb[0].mxu0
      %689 = vmatprep.mubr.bf16.mxu0 0
      %690 = vmatmul.mubr.bf16.gmra.mrb[0].mxu0 %v500
      %v691 = vpop.f32.mrb[0].mxu0
      %v692 = vadd.f32 0.0, %v691
      %v693 = vpop.f32.mrb[0].mxu0
      %v694 = vpop.f32.mrb[0].mxu0
      %v695 = vadd.f32 0.0, %v694
      %v696 = vpop.f32.mrb[0].mxu0
      %697 = vmatprep.mubr.bf16.mxu0 0
      %698 = vmatmul.mubr.bf16.gmra.mrb[0].mxu0 %v501
      %v699 = vpop.f32.mrb[0].mxu0
      %v700 = vadd.f32 0.0, %v699
      %v701 = vpop.f32.mrb[0].mxu0
      %v702 = vpop.f32.mrb[0].mxu0
      %v703 = vadd.f32 0.0, %v702
      %v704 = vpop.f32.mrb[0].mxu0
      %705 = vmatprep.mubr.bf16.mxu0 0
      %706 = vmatmul.mubr.bf16.gmra.mrb[0].mxu0 %v502
      %v707 = vpop.f32.mrb[0].mxu0
      %v708 = vadd.f32 0.0, %v707
      %v709 = vpop.f32.mrb[0].mxu0
      %v710 = vpop.f32.mrb[0].mxu0
      %v711 = vadd.f32 0.0, %v710
      %v712 = vpop.f32.mrb[0].mxu0
      %713 = vmatprep.mubr.bf16.mxu0 0
      %714 = vmatmul.mubr.bf16.gmra.mrb[0].mxu0 %v503
      %v715 = vpop.f32.mrb[0].mxu0
      %v716 = vadd.f32 0.0, %v715
      %v717 = vpop.f32.mrb[0].mxu0
      %v718 = vpop.f32.mrb[0].mxu0
      %v719 = vadd.f32 0.0, %v718
      %v720 = vpop.f32.mrb[0].mxu0
      %721 = vmatprep.mubr.bf16.mxu0 0
      %722 = vmatmul.mubr.bf16.gmra.mrb[0].mxu0 %v504
      %v723 = vpop.f32.mrb[0].mxu0
      %v724 = vadd.f32 0.0, %v723
      %v725 = vpop.f32.mrb[0].mxu0
      %v726 = vpop.f32.mrb[0].mxu0
      %v727 = vadd.f32 0.0, %v726
      %v728 = vpop.f32.mrb[0].mxu0
      %729 = vdwg.mxu0
      %v730 = vadd.f32 %v341, %v604
      %v731 = vadd.f32 %v342, %v607
      %v732 = vadd.f32 %v343, %v612
      %v733 = vadd.f32 %v344, %v615
      %v734 = vadd.f32 %v345, %v620
      %v735 = vadd.f32 %v346, %v623
      %v736 = vadd.f32 %v347, %v628
      %v737 = vadd.f32 %v348, %v631
      %v738 = vadd.f32 %v349, %v636
      %v739 = vadd.f32 %v350, %v639
      %v740 = vadd.f32 %v351, %v644
      %v741 = vadd.f32 %v352, %v647
      %v742 = vadd.f32 %v353, %v652
      %v743 = vadd.f32 %v354, %v655
      %v744 = vadd.f32 %v355, %v660
      %v745 = vadd.f32 %v356, %v663
      %v746 = vadd.f32 %v357, %v668
      %v747 = vadd.f32 %v358, %v671
      %v748 = vadd.f32 %v359, %v676
      %v749 = vadd.f32 %v360, %v679
      %v750 = vadd.f32 %v361, %v684
      %v751 = vadd.f32 %v362, %v687
      %v752 = vadd.f32 %v363, %v692
      %v753 = vadd.f32 %v364, %v695
      %v754 = vadd.f32 %v365, %v700
      %v755 = vadd.f32 %v366, %v703
      %v756 = vadd.f32 %v367, %v708
      %v757 = vadd.f32 %v368, %v711
      %v758 = vadd.f32 %v369, %v716
      %v759 = vadd.f32 %v370, %v719
      %v760 = vadd.f32 %v371, %v724
      %v761 = vadd.f32 %v372, %v727
      %762 = vst [vmem:[#allocation2] sm:$0xff] %v730
      %763 = vst [vmem:[#allocation2 + $0x8] sm:$0xff] %v731
      %764 = vst [vmem:[#allocation2 + $0x10] sm:$0xff] %v732
      %765 = vst [vmem:[#allocation2 + $0x18] sm:$0xff] %v733
      %766 = vst [vmem:[#allocation2 + $0x20] sm:$0xff] %v734
      %767 = vst [vmem:[#allocation2 + $0x28] sm:$0xff] %v735
      %768 = vst [vmem:[#allocation2 + $0x30] sm:$0xff] %v736
      %769 = vst [vmem:[#allocation2 + $0x38] sm:$0xff] %v737
      %770 = vst [vmem:[#allocation2 + $0x40] sm:$0xff] %v738
      %771 = vst [vmem:[#allocation2 + $0x48] sm:$0xff] %v739
      %772 = vst [vmem:[#allocation2 + $0x50] sm:$0xff] %v740
      %773 = vst [vmem:[#allocation2 + $0x58] sm:$0xff] %v741
      %774 = vst [vmem:[#allocation2 + $0x60] sm:$0xff] %v742
      %775 = vst [vmem:[#allocation2 + $0x68] sm:$0xff] %v743
      %776 = vst [vmem:[#allocation2 + $0x70] sm:$0xff] %v744
      %777 = vst [vmem:[#allocation2 + $0x78] sm:$0xff] %v745
      %778 = vst [vmem:[#allocation2 + $0x80] sm:$0xff] %v746
      %779 = vst [vmem:[#allocation2 + $0x88] sm:$0xff] %v747
      %780 = vst [vmem:[#allocation2 + $0x90] sm:$0xff] %v748
      %781 = vst [vmem:[#allocation2 + $0x98] sm:$0xff] %v749
      %782 = vst [vmem:[#allocation2 + $0xa0] sm:$0xff] %v750
      %783 = vst [vmem:[#allocation2 + $0xa8] sm:$0xff] %v751
      %784 = vst [vmem:[#allocation2 + $0xb0] sm:$0xff] %v752
      %785 = vst [vmem:[#allocation2 + $0xb8] sm:$0xff] %v753
      %786 = vst [vmem:[#allocation2 + $0xc0] sm:$0xff] %v754
      %787 = vst [vmem:[#allocation2 + $0xc8] sm:$0xff] %v755
      %788 = vst [vmem:[#allocation2 + $0xd0] sm:$0xff] %v756
      %789 = vst [vmem:[#allocation2 + $0xd8] sm:$0xff] %v757
      %790 = vst [vmem:[#allocation2 + $0xe0] sm:$0xff] %v758
      %791 = vst [vmem:[#allocation2 + $0xe8] sm:$0xff] %v759
      %792 = vst [vmem:[#allocation2 + $0xf0] sm:$0xff] %v760
      %793 = vst [vmem:[#allocation2 + $0xf8] sm:$0xff] %v761
      // Predicated region
      $region41: #{rep_n_bottleneck_forward.3} parent=35 // pred_check
        %p794 = pneg %p304
      $region42: #{rep_n_bottleneck_forward.3} parent=35 // pred_check_branch
        %796 = sbr.rel (%p794) target = $region44
      $region43: #{rep_n_bottleneck_forward.3} parent=35 // pred_region
        %v797 = vld [vmem:[#allocation2] sm:$0xff]
        %v798 = vld [vmem:[#allocation2 + $0x8] sm:$0xff]
        %v799 = vld [vmem:[#allocation2 + $0x10] sm:$0xff]
        %v800 = vld [vmem:[#allocation2 + $0x18] sm:$0xff]
        %v801 = vld [vmem:[#allocation2 + $0x20] sm:$0xff]
        %v802 = vld [vmem:[#allocation2 + $0x28] sm:$0xff]
        %v803 = vld [vmem:[#allocation2 + $0x30] sm:$0xff]
        %v804 = vld [vmem:[#allocation2 + $0x38] sm:$0xff]
        %v805 = vld [vmem:[#allocation2 + $0x40] sm:$0xff]
        %v806 = vld [vmem:[#allocation2 + $0x48] sm:$0xff]
        %v807 = vld [vmem:[#allocation2 + $0x50] sm:$0xff]
        %v808 = vld [vmem:[#allocation2 + $0x58] sm:$0xff]
        %v809 = vld [vmem:[#allocation2 + $0x60] sm:$0xff]
        %v810 = vld [vmem:[#allocation2 + $0x68] sm:$0xff]
        %v811 = vld [vmem:[#allocation2 + $0x70] sm:$0xff]
        %v812 = vld [vmem:[#allocation2 + $0x78] sm:$0xff]
        %v813 = vld [vmem:[#allocation2 + $0x80] sm:$0xff]
        %v814 = vld [vmem:[#allocation2 + $0x88] sm:$0xff]
        %v815 = vld [vmem:[#allocation2 + $0x90] sm:$0xff]
        %v816 = vld [vmem:[#allocation2 + $0x98] sm:$0xff]
        %v817 = vld [vmem:[#allocation2 + $0xa0] sm:$0xff]
        %v818 = vld [vmem:[#allocation2 + $0xa8] sm:$0xff]
        %v819 = vld [vmem:[#allocation2 + $0xb0] sm:$0xff]
        %v820 = vld [vmem:[#allocation2 + $0xb8] sm:$0xff]
        %v821 = vld [vmem:[#allocation2 + $0xc0] sm:$0xff]
        %v822 = vld [vmem:[#allocation2 + $0xc8] sm:$0xff]
        %v823 = vld [vmem:[#allocation2 + $0xd0] sm:$0xff]
        %v824 = vld [vmem:[#allocation2 + $0xd8] sm:$0xff]
        %v825 = vld [vmem:[#allocation2 + $0xe0] sm:$0xff]
        %v826 = vld [vmem:[#allocation2 + $0xe8] sm:$0xff]
        %v827 = vld [vmem:[#allocation2 + $0xf0] sm:$0xff]
        %v828 = vld [vmem:[#allocation2 + $0xf8] sm:$0xff]
        %v829 = vld [vmem:[%s284] sm:$0x1]
        %v831 = vlaneseq
        %v832 = vshrl.u32 %v831, 7
        %v833 = vsub.s32 0, %v832
        %v834 = vrot.slane %v829, %v833
        %v836 = vadd.f32 %v797, %v834
        %v837 = vadd.f32 %v798, %v834
        %v838 = vadd.f32 %v799, %v834
        %v839 = vadd.f32 %v800, %v834
        %v840 = vadd.f32 %v801, %v834
        %v841 = vadd.f32 %v802, %v834
        %v842 = vadd.f32 %v803, %v834
        %v843 = vadd.f32 %v804, %v834
        %v844 = vadd.f32 %v805, %v834
        %v845 = vadd.f32 %v806, %v834
        %v846 = vadd.f32 %v807, %v834
        %v847 = vadd.f32 %v808, %v834
        %v848 = vadd.f32 %v809, %v834
        %v849 = vadd.f32 %v810, %v834
        %v850 = vadd.f32 %v811, %v834
        %v851 = vadd.f32 %v812, %v834
        %v852 = vadd.f32 %v813, %v834
        %v853 = vadd.f32 %v814, %v834
        %v854 = vadd.f32 %v815, %v834
        %v855 = vadd.f32 %v816, %v834
        %v856 = vadd.f32 %v817, %v834
        %v857 = vadd.f32 %v818, %v834
        %v858 = vadd.f32 %v819, %v834
        %v859 = vadd.f32 %v820, %v834
        %v860 = vadd.f32 %v821, %v834
        %v861 = vadd.f32 %v822, %v834
        %v862 = vadd.f32 %v823, %v834
        %v863 = vadd.f32 %v824, %v834
        %v864 = vadd.f32 %v825, %v834
        %v865 = vadd.f32 %v826, %v834
        %v866 = vadd.f32 %v827, %v834
        %v867 = vadd.f32 %v828, %v834
        %v868 = vsub.f32 0.0, %v836
        %v869 = vsub.f32 0.0, %v837
        %v870 = vsub.f32 0.0, %v838
        %v871 = vsub.f32 0.0, %v839
        %v872 = vsub.f32 0.0, %v840
        %v873 = vsub.f32 0.0, %v841
        %v874 = vsub.f32 0.0, %v842
        %v875 = vsub.f32 0.0, %v843
        %v876 = vsub.f32 0.0, %v844
        %v877 = vsub.f32 0.0, %v845
        %v878 = vsub.f32 0.0, %v846
        %v879 = vsub.f32 0.0, %v847
        %v880 = vsub.f32 0.0, %v848
        %v881 = vsub.f32 0.0, %v849
        %v882 = vsub.f32 0.0, %v850
        %v883 = vsub.f32 0.0, %v851
        %v884 = vsub.f32 0.0, %v852
        %v885 = vsub.f32 0.0, %v853
        %v886 = vsub.f32 0.0, %v854
        %v887 = vsub.f32 0.0, %v855
        %v888 = vsub.f32 0.0, %v856
        %v889 = vsub.f32 0.0, %v857
        %v890 = vsub.f32 0.0, %v858
        %v891 = vsub.f32 0.0, %v859
        %v892 = vsub.f32 0.0, %v860
        %v893 = vsub.f32 0.0, %v861
        %v894 = vsub.f32 0.0, %v862
        %v895 = vsub.f32 0.0, %v863
        %v896 = vsub.f32 0.0, %v864
        %v897 = vsub.f32 0.0, %v865
        %v898 = vsub.f32 0.0, %v866
        %v899 = vsub.f32 0.0, %v867
        %v900 = vmul.f32 %v868, 1.442695
        %v901 = vpow.pop %v900
        %v902 = vmul.f32 %v869, 1.442695
        %v903 = vpow.pop %v902
        %v904 = vmul.f32 %v870, 1.442695
        %v905 = vpow.pop %v904
        %v906 = vmul.f32 %v871, 1.442695
        %v907 = vpow.pop %v906
        %v908 = vmul.f32 %v872, 1.442695
        %v909 = vpow.pop %v908
        %v910 = vmul.f32 %v873, 1.442695
        %v911 = vpow.pop %v910
        %v912 = vmul.f32 %v874, 1.442695
        %v913 = vpow.pop %v912
        %v914 = vmul.f32 %v875, 1.442695
        %v915 = vpow.pop %v914
        %v916 = vmul.f32 %v876, 1.442695
        %v917 = vpow.pop %v916
        %v918 = vmul.f32 %v877, 1.442695
        %v919 = vpow.pop %v918
        %v920 = vmul.f32 %v878, 1.442695
        %v921 = vpow.pop %v920
        %v922 = vmul.f32 %v879, 1.442695
        %v923 = vpow.pop %v922
        %v924 = vmul.f32 %v880, 1.442695
        %v925 = vpow.pop %v924
        %v926 = vmul.f32 %v881, 1.442695
        %v927 = vpow.pop %v926
        %v928 = vmul.f32 %v882, 1.442695
        %v929 = vpow.pop %v928
        %v930 = vmul.f32 %v883, 1.442695
        %v931 = vpow.pop %v930
        %v932 = vmul.f32 %v884, 1.442695
        %v933 = vpow.pop %v932
        %v934 = vmul.f32 %v885, 1.442695
        %v935 = vpow.pop %v934
        %v936 = vmul.f32 %v886, 1.442695
        %v937 = vpow.pop %v936
        %v938 = vmul.f32 %v887, 1.442695
        %v939 = vpow.pop %v938
        %v940 = vmul.f32 %v888, 1.442695
        %v941 = vpow.pop %v940
        %v942 = vmul.f32 %v889, 1.442695
        %v943 = vpow.pop %v942
        %v944 = vmul.f32 %v890, 1.442695
        %v945 = vpow.pop %v944
        %v946 = vmul.f32 %v891, 1.442695
        %v947 = vpow.pop %v946
        %v948 = vmul.f32 %v892, 1.442695
        %v949 = vpow.pop %v948
        %v950 = vmul.f32 %v893, 1.442695
        %v951 = vpow.pop %v950
        %v952 = vmul.f32 %v894, 1.442695
        %v953 = vpow.pop %v952
        %v954 = vmul.f32 %v895, 1.442695
        %v955 = vpow.pop %v954
        %v956 = vmul.f32 %v896, 1.442695
        %v957 = vpow.pop %v956
        %v958 = vmul.f32 %v897, 1.442695
        %v959 = vpow.pop %v958
        %v960 = vmul.f32 %v898, 1.442695
        %v961 = vpow.pop %v960
        %v962 = vmul.f32 %v899, 1.442695
        %v963 = vpow.pop %v962
        %v964 = vadd.f32 %v901, 1.0
        %v965 = vadd.f32 %v903, 1.0
        %v966 = vadd.f32 %v905, 1.0
        %v967 = vadd.f32 %v907, 1.0
        %v968 = vadd.f32 %v909, 1.0
        %v969 = vadd.f32 %v911, 1.0
        %v970 = vadd.f32 %v913, 1.0
        %v971 = vadd.f32 %v915, 1.0
        %v972 = vadd.f32 %v917, 1.0
        %v973 = vadd.f32 %v919, 1.0
        %v974 = vadd.f32 %v921, 1.0
        %v975 = vadd.f32 %v923, 1.0
        %v976 = vadd.f32 %v925, 1.0
        %v977 = vadd.f32 %v927, 1.0
        %v978 = vadd.f32 %v929, 1.0
        %v979 = vadd.f32 %v931, 1.0
        %v980 = vadd.f32 %v933, 1.0
        %v981 = vadd.f32 %v935, 1.0
        %v982 = vadd.f32 %v937, 1.0
        %v983 = vadd.f32 %v939, 1.0
        %v984 = vadd.f32 %v941, 1.0
        %v985 = vadd.f32 %v943, 1.0
        %v986 = vadd.f32 %v945, 1.0
        %v987 = vadd.f32 %v947, 1.0
        %v988 = vadd.f32 %v949, 1.0
        %v989 = vadd.f32 %v951, 1.0
        %v990 = vadd.f32 %v953, 1.0
        %v991 = vadd.f32 %v955, 1.0
        %v992 = vadd.f32 %v957, 1.0
        %v993 = vadd.f32 %v959, 1.0
        %v994 = vadd.f32 %v961, 1.0
        %v995 = vadd.f32 %v963, 1.0
        %v996 = vrcp.pop %v964
        %v997 = vrcp.pop %v965
        %v998 = vrcp.pop %v966
        %v999 = vrcp.pop %v967
        %v1000 = vrcp.pop %v968
        %v1001 = vrcp.pop %v969
        %v1002 = vrcp.pop %v970
        %v1003 = vrcp.pop %v971
        %v1004 = vrcp.pop %v972
        %v1005 = vrcp.pop %v973
        %v1006 = vrcp.pop %v974
        %v1007 = vrcp.pop %v975
        %v1008 = vrcp.pop %v976
        %v1009 = vrcp.pop %v977
        %v1010 = vrcp.pop %v978
        %v1011 = vrcp.pop %v979
        %v1012 = vrcp.pop %v980
        %v1013 = vrcp.pop %v981
        %v1014 = vrcp.pop %v982
        %v1015 = vrcp.pop %v983
        %v1016 = vrcp.pop %v984
        %v1017 = vrcp.pop %v985
        %v1018 = vrcp.pop %v986
        %v1019 = vrcp.pop %v987
        %v1020 = vrcp.pop %v988
        %v1021 = vrcp.pop %v989
        %v1022 = vrcp.pop %v990
        %v1023 = vrcp.pop %v991
        %v1024 = vrcp.pop %v992
        %v1025 = vrcp.pop %v993
        %v1026 = vrcp.pop %v994
        %v1027 = vrcp.pop %v995
        %v1028 = vmul.f32 %v836, %v996
        %v1029 = vmul.f32 %v837, %v997
        %v1030 = vmul.f32 %v838, %v998
        %v1031 = vmul.f32 %v839, %v999
        %v1032 = vmul.f32 %v840, %v1000
        %v1033 = vmul.f32 %v841, %v1001
        %v1034 = vmul.f32 %v842, %v1002
        %v1035 = vmul.f32 %v843, %v1003
        %v1036 = vmul.f32 %v844, %v1004
        %v1037 = vmul.f32 %v845, %v1005
        %v1038 = vmul.f32 %v846, %v1006
        %v1039 = vmul.f32 %v847, %v1007
        %v1040 = vmul.f32 %v848, %v1008
        %v1041 = vmul.f32 %v849, %v1009
        %v1042 = vmul.f32 %v850, %v1010
        %v1043 = vmul.f32 %v851, %v1011
        %v1044 = vmul.f32 %v852, %v1012
        %v1045 = vmul.f32 %v853, %v1013
        %v1046 = vmul.f32 %v854, %v1014
        %v1047 = vmul.f32 %v855, %v1015
        %v1048 = vmul.f32 %v856, %v1016
        %v1049 = vmul.f32 %v857, %v1017
        %v1050 = vmul.f32 %v858, %v1018
        %v1051 = vmul.f32 %v859, %v1019
        %v1052 = vmul.f32 %v860, %v1020
        %v1053 = vmul.f32 %v861, %v1021
        %v1054 = vmul.f32 %v862, %v1022
        %v1055 = vmul.f32 %v863, %v1023
        %v1056 = vmul.f32 %v864, %v1024
        %v1057 = vmul.f32 %v865, %v1025
        %v1058 = vmul.f32 %v866, %v1026
        %v1059 = vmul.f32 %v867, %v1027
        %v1060 = vld [vmem:[%s292] sm:$0xf]
        %v1061 = vld [vmem:[%s292 + $0x4] sm:$0xf]
        %v1062 = vld [vmem:[%s292 + $0x8] sm:$0xf]
        %v1063 = vld [vmem:[%s292 + $0xc] sm:$0xf]
        %v1064 = vld [vmem:[%s292 + $0x10] sm:$0xf]
        %v1065 = vld [vmem:[%s292 + $0x14] sm:$0xf]
        %v1066 = vld [vmem:[%s292 + $0x18] sm:$0xf]
        %v1067 = vld [vmem:[%s292 + $0x1c] sm:$0xf]
        %v1068 = vld [vmem:[%s292 + $0x20] sm:$0xf]
        %v1069 = vld [vmem:[%s292 + $0x24] sm:$0xf]
        %v1070 = vld [vmem:[%s292 + $0x28] sm:$0xf]
        %v1071 = vld [vmem:[%s292 + $0x2c] sm:$0xf]
        %v1072 = vld [vmem:[%s292 + $0x30] sm:$0xf]
        %v1073 = vld [vmem:[%s292 + $0x34] sm:$0xf]
        %v1074 = vld [vmem:[%s292 + $0x38] sm:$0xf]
        %v1075 = vld [vmem:[%s292 + $0x3c] sm:$0xf]
        %v1076 = vld [vmem:[%s292 + $0x40] sm:$0xf]
        %v1077 = vld [vmem:[%s292 + $0x44] sm:$0xf]
        %v1078 = vld [vmem:[%s292 + $0x48] sm:$0xf]
        %v1079 = vld [vmem:[%s292 + $0x4c] sm:$0xf]
        %v1080 = vld [vmem:[%s292 + $0x50] sm:$0xf]
        %v1081 = vld [vmem:[%s292 + $0x54] sm:$0xf]
        %v1082 = vld [vmem:[%s292 + $0x58] sm:$0xf]
        %v1083 = vld [vmem:[%s292 + $0x5c] sm:$0xf]
        %v1084 = vld [vmem:[%s292 + $0x60] sm:$0xf]
        %v1085 = vld [vmem:[%s292 + $0x64] sm:$0xf]
        %v1086 = vld [vmem:[%s292 + $0x68] sm:$0xf]
        %v1087 = vld [vmem:[%s292 + $0x6c] sm:$0xf]
        %v1088 = vld [vmem:[%s292 + $0x70] sm:$0xf]
        %v1089 = vld [vmem:[%s292 + $0x74] sm:$0xf]
        %v1090 = vld [vmem:[%s292 + $0x78] sm:$0xf]
        %v1091 = vld [vmem:[%s292 + $0x7c] sm:$0xf]
        %v1092 = vunpack.c.l.bf16 %v1060
        %v1093 = vunpack.c.l.bf16 %v1061
        %v1094 = vunpack.c.l.bf16 %v1062
        %v1095 = vunpack.c.l.bf16 %v1063
        %v1096 = vunpack.c.l.bf16 %v1064
        %v1097 = vunpack.c.l.bf16 %v1065
        %v1098 = vunpack.c.l.bf16 %v1066
        %v1099 = vunpack.c.l.bf16 %v1067
        %v1100 = vunpack.c.l.bf16 %v1068
        %v1101 = vunpack.c.l.bf16 %v1069
        %v1102 = vunpack.c.l.bf16 %v1070
        %v1103 = vunpack.c.l.bf16 %v1071
        %v1104 = vunpack.c.l.bf16 %v1072
        %v1105 = vunpack.c.l.bf16 %v1073
        %v1106 = vunpack.c.l.bf16 %v1074
        %v1107 = vunpack.c.l.bf16 %v1075
        %v1108 = vunpack.c.l.bf16 %v1076
        %v1109 = vunpack.c.l.bf16 %v1077
        %v1110 = vunpack.c.l.bf16 %v1078
        %v1111 = vunpack.c.l.bf16 %v1079
        %v1112 = vunpack.c.l.bf16 %v1080
        %v1113 = vunpack.c.l.bf16 %v1081
        %v1114 = vunpack.c.l.bf16 %v1082
        %v1115 = vunpack.c.l.bf16 %v1083
        %v1116 = vunpack.c.l.bf16 %v1084
        %v1117 = vunpack.c.l.bf16 %v1085
        %v1118 = vunpack.c.l.bf16 %v1086
        %v1119 = vunpack.c.l.bf16 %v1087
        %v1120 = vunpack.c.l.bf16 %v1088
        %v1121 = vunpack.c.l.bf16 %v1089
        %v1122 = vunpack.c.l.bf16 %v1090
        %v1123 = vunpack.c.l.bf16 %v1091
        %v1124 = vadd.f32 %v1028, %v1092
        %v1125 = vadd.f32 %v1029, %v1093
        %v1126 = vadd.f32 %v1030, %v1094
        %v1127 = vadd.f32 %v1031, %v1095
        %v1128 = vadd.f32 %v1032, %v1096
        %v1129 = vadd.f32 %v1033, %v1097
        %v1130 = vadd.f32 %v1034, %v1098
        %v1131 = vadd.f32 %v1035, %v1099
        %v1132 = vadd.f32 %v1036, %v1100
        %v1133 = vadd.f32 %v1037, %v1101
        %v1134 = vadd.f32 %v1038, %v1102
        %v1135 = vadd.f32 %v1039, %v1103
        %v1136 = vadd.f32 %v1040, %v1104
        %v1137 = vadd.f32 %v1041, %v1105
        %v1138 = vadd.f32 %v1042, %v1106
        %v1139 = vadd.f32 %v1043, %v1107
        %v1140 = vadd.f32 %v1044, %v1108
        %v1141 = vadd.f32 %v1045, %v1109
        %v1142 = vadd.f32 %v1046, %v1110
        %v1143 = vadd.f32 %v1047, %v1111
        %v1144 = vadd.f32 %v1048, %v1112
        %v1145 = vadd.f32 %v1049, %v1113
        %v1146 = vadd.f32 %v1050, %v1114
        %v1147 = vadd.f32 %v1051, %v1115
        %v1148 = vadd.f32 %v1052, %v1116
        %v1149 = vadd.f32 %v1053, %v1117
        %v1150 = vadd.f32 %v1054, %v1118
        %v1151 = vadd.f32 %v1055, %v1119
        %v1152 = vadd.f32 %v1056, %v1120
        %v1153 = vadd.f32 %v1057, %v1121
        %v1154 = vadd.f32 %v1058, %v1122
        %v1155 = vadd.f32 %v1059, %v1123
        %v1156 = vpack.c.bf16 %v1125, %v1124
        %v1157 = vpack.c.bf16 %v1127, %v1126
        %v1158 = vpack.c.bf16 %v1129, %v1128
        %v1159 = vpack.c.bf16 %v1131, %v1130
        %v1160 = vpack.c.bf16 %v1133, %v1132
        %v1161 = vpack.c.bf16 %v1135, %v1134
        %v1162 = vpack.c.bf16 %v1137, %v1136
        %v1163 = vpack.c.bf16 %v1139, %v1138
        %v1164 = vpack.c.bf16 %v1141, %v1140
        %v1165 = vpack.c.bf16 %v1143, %v1142
        %v1166 = vpack.c.bf16 %v1145, %v1144
        %v1167 = vpack.c.bf16 %v1147, %v1146
        %v1168 = vpack.c.bf16 %v1149, %v1148
        %v1169 = vpack.c.bf16 %v1151, %v1150
        %v1170 = vpack.c.bf16 %v1153, %v1152
        %v1171 = vpack.c.bf16 %v1155, %v1154
        %v1188 = vunpack.c.l.b16 %v1156
        %v1189 = vunpack.c.h.b16 %v1156
        %v1190 = vunpack.c.l.b16 %v1157
        %v1191 = vunpack.c.h.b16 %v1157
        %v1192 = vunpack.c.l.b16 %v1158
        %v1193 = vunpack.c.h.b16 %v1158
        %v1194 = vunpack.c.l.b16 %v1159
        %v1195 = vunpack.c.h.b16 %v1159
        %v1196 = vunpack.c.l.b16 %v1160
        %v1197 = vunpack.c.h.b16 %v1160
        %v1198 = vunpack.c.l.b16 %v1161
        %v1199 = vunpack.c.h.b16 %v1161
        %v1200 = vunpack.c.l.b16 %v1162
        %v1201 = vunpack.c.h.b16 %v1162
        %v1202 = vunpack.c.l.b16 %v1163
        %v1203 = vunpack.c.h.b16 %v1163
        %v1204 = vunpack.c.l.b16 %v1164
        %v1205 = vunpack.c.h.b16 %v1164
        %v1206 = vunpack.c.l.b16 %v1165
        %v1207 = vunpack.c.h.b16 %v1165
        %v1208 = vunpack.c.l.b16 %v1166
        %v1209 = vunpack.c.h.b16 %v1166
        %v1210 = vunpack.c.l.b16 %v1167
        %v1211 = vunpack.c.h.b16 %v1167
        %v1212 = vunpack.c.l.b16 %v1168
        %v1213 = vunpack.c.h.b16 %v1168
        %v1214 = vunpack.c.l.b16 %v1169
        %v1215 = vunpack.c.h.b16 %v1169
        %v1216 = vunpack.c.l.b16 %v1170
        %v1217 = vunpack.c.h.b16 %v1170
        %v1218 = vunpack.c.l.b16 %v1171
        %v1219 = vunpack.c.h.b16 %v1171
        %v1220 = vpack.c.b16 %v1188, %v1188
        %v1221 = vpack.c.b16 %v1189, %v1189
        %v1222 = vpack.c.b16 %v1190, %v1190
        %v1223 = vpack.c.b16 %v1191, %v1191
        %v1224 = vpack.c.b16 %v1192, %v1192
        %v1225 = vpack.c.b16 %v1193, %v1193
        %v1226 = vpack.c.b16 %v1194, %v1194
        %v1227 = vpack.c.b16 %v1195, %v1195
        %v1228 = vpack.c.b16 %v1196, %v1196
        %v1229 = vpack.c.b16 %v1197, %v1197
        %v1230 = vpack.c.b16 %v1198, %v1198
        %v1231 = vpack.c.b16 %v1199, %v1199
        %v1232 = vpack.c.b16 %v1200, %v1200
        %v1233 = vpack.c.b16 %v1201, %v1201
        %v1234 = vpack.c.b16 %v1202, %v1202
        %v1235 = vpack.c.b16 %v1203, %v1203
        %v1236 = vpack.c.b16 %v1204, %v1204
        %v1237 = vpack.c.b16 %v1205, %v1205
        %v1238 = vpack.c.b16 %v1206, %v1206
        %v1239 = vpack.c.b16 %v1207, %v1207
        %v1240 = vpack.c.b16 %v1208, %v1208
        %v1241 = vpack.c.b16 %v1209, %v1209
        %v1242 = vpack.c.b16 %v1210, %v1210
        %v1243 = vpack.c.b16 %v1211, %v1211
        %v1244 = vpack.c.b16 %v1212, %v1212
        %v1245 = vpack.c.b16 %v1213, %v1213
        %v1246 = vpack.c.b16 %v1214, %v1214
        %v1247 = vpack.c.b16 %v1215, %v1215
        %v1248 = vpack.c.b16 %v1216, %v1216
        %v1249 = vpack.c.b16 %v1217, %v1217
        %v1250 = vpack.c.b16 %v1218, %v1218
        %v1251 = vpack.c.b16 %v1219, %v1219
        %1284 = vst [vmem:[%s301] sm:$0xf] %v1220
        %1285 = vst [vmem:[%s301 + $0x4] sm:$0xf] %v1221
        %1286 = vst [vmem:[%s301 + $0x8] sm:$0xf] %v1222
        %1287 = vst [vmem:[%s301 + $0xc] sm:$0xf] %v1223
        %1288 = vst [vmem:[%s301 + $0x10] sm:$0xf] %v1224
        %1289 = vst [vmem:[%s301 + $0x14] sm:$0xf] %v1225
        %1290 = vst [vmem:[%s301 + $0x18] sm:$0xf] %v1226
        %1291 = vst [vmem:[%s301 + $0x1c] sm:$0xf] %v1227
        %1292 = vst [vmem:[%s301 + $0x20] sm:$0xf] %v1228
        %1293 = vst [vmem:[%s301 + $0x24] sm:$0xf] %v1229
        %1294 = vst [vmem:[%s301 + $0x28] sm:$0xf] %v1230
        %1295 = vst [vmem:[%s301 + $0x2c] sm:$0xf] %v1231
        %1296 = vst [vmem:[%s301 + $0x30] sm:$0xf] %v1232
        %1297 = vst [vmem:[%s301 + $0x34] sm:$0xf] %v1233
        %1298 = vst [vmem:[%s301 + $0x38] sm:$0xf] %v1234
        %1299 = vst [vmem:[%s301 + $0x3c] sm:$0xf] %v1235
        %1300 = vst [vmem:[%s301 + $0x40] sm:$0xf] %v1236
        %1301 = vst [vmem:[%s301 + $0x44] sm:$0xf] %v1237
        %1302 = vst [vmem:[%s301 + $0x48] sm:$0xf] %v1238
        %1303 = vst [vmem:[%s301 + $0x4c] sm:$0xf] %v1239
        %1304 = vst [vmem:[%s301 + $0x50] sm:$0xf] %v1240
        %1305 = vst [vmem:[%s301 + $0x54] sm:$0xf] %v1241
        %1306 = vst [vmem:[%s301 + $0x58] sm:$0xf] %v1242
        %1307 = vst [vmem:[%s301 + $0x5c] sm:$0xf] %v1243
        %1308 = vst [vmem:[%s301 + $0x60] sm:$0xf] %v1244
        %1309 = vst [vmem:[%s301 + $0x64] sm:$0xf] %v1245
        %1310 = vst [vmem:[%s301 + $0x68] sm:$0xf] %v1246
        %1311 = vst [vmem:[%s301 + $0x6c] sm:$0xf] %v1247
        %1312 = vst [vmem:[%s301 + $0x70] sm:$0xf] %v1248
        %1313 = vst [vmem:[%s301 + $0x74] sm:$0xf] %v1249
        %1314 = vst [vmem:[%s301 + $0x78] sm:$0xf] %v1250
        %1315 = vst [vmem:[%s301 + $0x7c] sm:$0xf] %v1251
      $region44: #{rep_n_bottleneck_forward.3} parent=35 // pred_fallthru
        _
      %s1316 = smul.u32 32, %s20
      %p1317 = scmp.lt.s32.totalorder %s1316, 63
      %s1318 = scalar_select %p1317, %s1316, 63
      %p1319 = scmp.lt.s32.totalorder %s21, 0
      %s1320 = scalar_select %p1319, %s21, 0
      %s1321 = sadd.s32 %s1320, %s1318
      %s1322 = smul.addr %s1321, 4
      %s1323 = scalar_lea.vmem %s4, %s1322
      // Predicated region
      $region45: #{rep_n_bottleneck_forward.3} parent=35 // pred_check
        %p1324 = pneg %p162
      $region46: #{rep_n_bottleneck_forward.3} parent=35 // pred_check_branch
        %1326 = sbr.rel (%p1324) target = $region48
      $region47: #{rep_n_bottleneck_forward.3} parent=35 // pred_region
        %s1327 = smul.u32 32, %s20
      $region48: #{rep_n_bottleneck_forward.3} parent=35 // pred_fallthru
        _
    $region36: #{rep_n_bottleneck_forward.3} parent=5 // pred_fallthru
      _
    %p1328 = scmp.le.s32.totalorder 2, %s10
    // Predicated region
    $region49: #{rep_n_bottleneck_forward.3} parent=5 // pred_check
      %p1329 = pneg %p1328
    $region50: #{rep_n_bottleneck_forward.3} parent=5 // pred_check_branch
      %1331 = sbr.rel (%p1329) target = $region52
    $region51: #{rep_n_bottleneck_forward.3} parent=5 // pred_region
      %s1332 = ssub.s32 %s10, 2
      // Predicated region
      $region53: #{rep_n_bottleneck_forward.3} parent=51 // pred_check
        %p1333 = pneg %p168
      $region54: #{rep_n_bottleneck_forward.3} parent=51 // pred_check_branch
        %1335 = sbr.rel (%p1333) target = $region56
      $region55: #{rep_n_bottleneck_forward.3} parent=51 // pred_region
        %s1336 = smul.u32 32, %s23
        %p1337 = scmp.lt.s32.totalorder %s1336, 63
        %s1338 = scalar_select %p1337, %s1336, 63
        %p1339 = scmp.lt.s32.totalorder %s24, 0
        %s1340 = scalar_select %p1339, %s24, 0
        %s1341 = sadd.s32 %s1340, %s1338
        %s1342 = smul.addr %s1341, 4
        %s1343 = scalar_lea.vmem %s4, %s1342
      $region56: #{rep_n_bottleneck_forward.3} parent=51 // pred_fallthru
        _
    $region52: #{rep_n_bottleneck_forward.3} parent=5 // pred_fallthru
      _
  $region6: #{rep_n_bottleneck_forward.3} parent=0 // loop_footer
    %s14 = sadd.s32 1, %s10
  $region7: #{rep_n_bottleneck_forward.3} parent=0 // loop_footer_branch
    %9 = sbr.rel target = $region3
  $region8: #{rep_n_bottleneck_forward.3} parent=0 // loop_exit
    _

</llo_original>
